<compile_context>
chip_gen: v7x
topology: tpu7x:2x2x1
jax: 0.10.0
libtpu: 0.0.40
codegen_flags: <defaults>
</compile_context>

<pallas_src>
import jax
import jax.numpy as jnp
from jax.experimental import pallas as pl
from jax.experimental.pallas import tpu as pltpu  # noqa: F401  (kept for TPU-specific tuning hooks)


# ------------------------------ Pallas kernel ------------------------------- #

def _to_bf16(v):
    """Exact-ish widen/narrow to bf16 (int8 -> f32 -> bf16 is exact for int8 values)."""
    if v.dtype == jnp.bfloat16:
        return v
    return v.astype(jnp.float32).astype(jnp.bfloat16)


def _fused_forward_kernel(x_ref, pool_ref,
                          w1_ref, sc1_ref, sh1_ref,
                          w2_ref, sc2_ref, sh2_ref,
                          whead_ref, hsc_ref, hb_ref,
                          wt3_ref, bt3_ref,
                          class_ref, dom_ref):
    """Whole BaseClassifier forward in one grid-less kernel; everything lives in VMEM."""
    M = x_ref.shape[0]                    # B * T rows
    B = class_ref.shape[0]
    T = M // B
    H = wt3_ref.shape[0]                  # 512
    num_class = class_ref.shape[1]

    # ---- gsf_fc1 (int8/bf16 weights -> bf16 MXU, f32 acc) + folded bias/bn1 + relu ----
    xb = x_ref[...].astype(jnp.bfloat16)
    h = jnp.dot(xb, _to_bf16(w1_ref[...]), preferred_element_type=jnp.float32)
    h = jnp.maximum(h * sc1_ref[...] + sh1_ref[...], 0.0).astype(jnp.bfloat16)
    # TODO(synk): nn.Dropout is identity in eval mode; training-mode dropout not implemented.

    # ---- gsf_fc2 + folded bias/bn2 + relu ----
    h = jnp.dot(h, _to_bf16(w2_ref[...]), preferred_element_type=jnp.float32)
    h = jnp.maximum(h * sc2_ref[...] + sh2_ref[...], 0.0).astype(jnp.bfloat16)   # (M, 512)

    # ---- torch.mean(gsf_out, 1): bf16 pooling matmul (exact 1.0 entries), 1/T in f32 ----
    gtf = jnp.dot(pool_ref[...], h, preferred_element_type=jnp.float32) * (1.0 / T)
    gtf_b = gtf.astype(jnp.bfloat16)                                             # (B, 512)

    # ---- fused head matmul: [gtd_fc1(+folded bn1) | gy_fc1(lane-padded)] ----
    head = jnp.dot(gtf_b, _to_bf16(whead_ref[...]), preferred_element_type=jnp.float32)
    head = head * hsc_ref[...] + hb_ref[...]                                     # (B, 640)

    # ---- gtd branch: ReverseLayerF is identity in forward ----
    ht = jnp.maximum(head[:, :H], 0.0).astype(jnp.bfloat16)
    d = jnp.dot(ht, wt3_ref[...], preferred_element_type=jnp.float32) + bt3_ref[...]
    d = d - jnp.max(d, axis=-1, keepdims=True)
    dom_ref[...] = d - jnp.log(jnp.sum(jnp.exp(d), axis=-1, keepdims=True))

    # ---- gy head: class logits + log_softmax ----
    c = head[:, H:H + num_class]
    c = c - jnp.max(c, axis=-1, keepdims=True)
    class_ref[...] = c - jnp.log(jnp.sum(jnp.exp(c), axis=-1, keepdims=True))


def _full_spec(shape):
    # Whole-array block (grid-less call: <3 MiB total, fits VMEM on every generation).
    return pl.BlockSpec(shape, lambda: tuple(0 for _ in shape))


# --------------------------- parameter creation ----------------------------- #

def init_params(key, num_class, n_features):
    """Raw (PyTorch-like) parameters, f32, weights stored (in_features, out_features)."""
    T, F = n_features              # 5, 1024
    H = 512
    ks = jax.random.split(key, 8)

    def lin(k, fan_in, fan_out):
        kw, kb = jax.random.split(k)
        bound = 1.0 / jnp.sqrt(jnp.float32(fan_in))
        w = jax.random.uniform(kw, (fan_in, fan_out), jnp.float32, -bound, bound)
        b = jax.random.uniform(kb, (fan_out,), jnp.float32, -bound, bound)
        return w, b

    def bn(k, c):
        k1, k2, k3 = jax.random.split(k, 3)
        gamma = jax.random.uniform(k1, (c,), jnp.float32, 0.5, 1.5)
        beta = jax.random.uniform(k2, (c,), jnp.float32, -0.5, 0.5)
        rmean = jax.random.uniform(k3, (c,), jnp.float32, -0.1, 0.1)
        rvar = jnp.ones((c,), jnp.float32)
        return gamma, beta, rmean, rvar

    return {
        "gsf_fc1": lin(ks[0], F, H),
        "gsf_bn1": bn(ks[1], T),       # BatchNorm1d(n_features[0]=5) over (B, 5, 512)
        "gsf_fc2": lin(ks[2], H, H),
        "gsf_bn2": bn(ks[3], T),
        "gy_fc1":  lin(ks[4], H, num_class),
        "gtd_fc1": lin(ks[5], H, H),
        "gtd_bn1": bn(ks[6], H),       # BatchNorm1d(512) over (B, 512)
        "gtd_fc3": lin(ks[7], H, 2),
    }


def prepare_inference_params(params, batch_size, quantize=True, eps=1e-5):
    """Fold eval-mode BatchNorms, biases and (optional) int8 dequant scales into per-row
    affine tables; quantize / cast weights; build the pooling matrix.  All done ONCE."""
    H = 512
    T = params["gsf_bn1"][0].shape[0]
    M = batch_size * T

    def fold(bn_params):
        gamma, beta, rmean, rvar = bn_params
        a = gamma / jnp.sqrt(rvar + eps)
        c = beta - rmean * a
        return a, c

    def quant(w):
        """Per-column symmetric int8 (v5e/v6e) or bf16 (v7x)."""
        if quantize:
            maxabs = jnp.max(jnp.abs(w), axis=0)
            scale = jnp.where(maxabs > 0, maxabs / 127.0, 1.0)
            wq = jnp.clip(jnp.round(w / scale), -127.0, 127.0).astype(jnp.int8)
            return wq, scale.astype(jnp.float32)
        return w.astype(jnp.bfloat16), jnp.ones((w.shape[1],), jnp.float32)

    w1, b1 = params["gsf_fc1"]; a1, c1 = fold(params["gsf_bn1"])
    w2, b2 = params["gsf_fc2"]; a2, c2 = fold(params["gsf_bn2"])
    wt1, bt1 = params["gtd_fc1"]; at, ct = fold(params["gtd_bn1"])
    wt3, bt3 = params["gtd_fc3"]
    wy, by = params["gy_fc1"]
    num_class = wy.shape[1]

    w1_q, s1 = quant(w1)
    w2_q, s2 = quant(w2)

    # gsf layers: per-(T-channel, feature) scale/shift with dequant scale, bias and BN folded:
    #   h = (x @ w_q) * (s[j]*a[t]) + (b[j]*a[t] + c[t])
    sc1 = a1[:, None] * s1[None, :]
    sh1 = a1[:, None] * b1[None, :] + c1[:, None]
    sc2 = a2[:, None] * s2[None, :]
    sh2 = a2[:, None] * b2[None, :] + c2[:, None]
    tile_rows = lambda t: jnp.tile(t, (batch_size, 1)).astype(jnp.float32)   # (M, 512)

    # gtd_bn1 (per-output-feature) folded into gtd_fc1; fuse [gtd_fc1 | gy_fc1 padded to 128].
    wt1_f = wt1 * at[None, :]
    bt1_f = bt1 * at + ct
    pad = 128
    wy_p = jnp.zeros((H, pad), jnp.float32).at[:, :num_class].set(wy)
    by_p = jnp.zeros((pad,), jnp.float32).at[:num_class].set(by)
    whead = jnp.concatenate([wt1_f, wy_p], axis=1)                 # (512, 640)
    whead_q, hs = quant(whead)
    hbias = jnp.concatenate([bt1_f, by_p])                         # (640,)

    # Temporal-mean pooling matrix (B, M) of exact 1.0 entries (bf16); 1/T applied in-kernel.
    col = jnp.arange(M)[None, :]
    row = jnp.arange(batch_size)[:, None]
    pool = ((col >= row * T) & (col < (row + 1) * T)).astype(jnp.bfloat16)

    f32 = jnp.float32
    return {
        "w1": w1_q, "sc1": tile_rows(sc1), "sh1": tile_rows(sh1),
        "w2": w2_q, "sc2": tile_rows(sc2), "sh2": tile_rows(sh2),
        "whead": whead_q,
        "hscale": hs[None, :].astype(f32),
        "hbias": hbias[None, :].astype(f32),
        "wt3": wt3.astype(jnp.bfloat16), "bt3": bt3[None, :].astype(f32),
        "pool": pool,
    }


# ------------------------------- forward pass ------------------------------- #

def base_classifier_forward(prep, x, num_class, temporal_type="pooling",
                            ablation_mask=(0, 1, 0, 0)):
    if temporal_type == "TRN":
        raise NotImplementedError
    B, T, F = x.shape
    M = B * T

    # Metadata-only reshape; bf16 cast of x happens inside the kernel (no extra XLA launch).
    xf = x.reshape(M, F)

    args = (xf, prep["pool"],
            prep["w1"], prep["sc1"], prep["sh1"],
            prep["w2"], prep["sc2"], prep["sh2"],
            prep["whead"], prep["hscale"], prep["hbias"],
            prep["wt3"], prep["bt3"])

    class_logit, temp_dom = pl.pallas_call(
        _fused_forward_kernel,
        out_shape=(jax.ShapeDtypeStruct((B, num_class), jnp.float32),
                   jax.ShapeDtypeStruct((B, 2), jnp.float32)),
        in_specs=[_full_spec(a.shape) for a in args],
        out_specs=(_full_spec((B, num_class)), _full_spec((B, 2))),
    )(*args)

    # ReverseLayerF only affects gradients; forward output is unchanged.
    return class_logit, (temp_dom if ablation_mask[1] else None)


# ---------------------- pure-JAX reference (same numerics) ------------------- #

def reference_forward(prep, x, num_class):
    B, T, F = x.shape
    H = prep["wt3"].shape[0]

    def deq(w):
        return w if w.dtype == jnp.bfloat16 else w.astype(jnp.float32).astype(jnp.bfloat16)

    xb = x.reshape(B * T, F).astype(jnp.bfloat16)
    h = jnp.dot(xb, deq(prep["w1"]), preferred_element_type=jnp.float32)
    h = jnp.maximum(h * prep["sc1"] + prep["sh1"], 0.0).astype(jnp.bfloat16)
    h = jnp.dot(h, deq(prep["w2"]), preferred_element_type=jnp.float32)
    h = jnp.maximum(h * prep["sc2"] + prep["sh2"], 0.0).astype(jnp.bfloat16)
    gtf = jnp.dot(prep["pool"], h, preferred_element_type=jnp.float32) * (1.0 / T)
    g = gtf.astype(jnp.bfloat16)

    head = jnp.dot(g, deq(prep["whead"]), preferred_element_type=jnp.float32)
    head = head * prep["hscale"] + prep["hbias"]
    ht = jnp.maximum(head[:, :H], 0.0).astype(jnp.bfloat16)
    d = jnp.dot(ht, prep["wt3"], preferred_element_type=jnp.float32) + prep["bt3"]
    c = head[:, H:H + num_class]
    return jax.nn.log_softmax(c, axis=-1), jax.nn.log_softmax(d, axis=-1)


# ----------------------------------- main ----------------------------------- #

if __name__ == "__main__":
    num_class = 8
    n_features = [5, 1024]
    B = 2

    key = jax.random.PRNGKey(0)
    kx, kp = jax.random.split(key)
    x = jax.random.normal(kx, (B, n_features[0], n_features[1]), jnp.float32)

    params = init_params(kp, num_class, n_features)

    # int8 weights on v5e/v6e (HBM-DMA bound); bf16 weights on v7x (no int MXU path).
    kind = jax.devices()[0].device_kind.lower()
    quantize = not ("v7" in kind or "7x" in kind)
    prep = prepare_inference_params(params, batch_size=B, quantize=quantize)

    fwd = jax.jit(lambda p, xx: base_classifier_forward(p, xx, num_class,
                                                        "pooling", (0, 1, 0, 0)))
    class_logit, temp_dom = fwd(prep, x)
    jax.block_until_ready((class_logit, temp_dom))

    # shape + log-softmax normalization checks
    assert class_logit.shape == (B, num_class)
    assert temp_dom.shape == (B, 2)
    assert jnp.allclose(jnp.sum(jnp.exp(class_logit), axis=1), 1.0, atol=1e-3)
    assert jnp.allclose(jnp.sum(jnp.exp(temp_dom), axis=1), 1.0, atol=1e-3)

    # pure-JAX reference with matching numerics (same folded/quantized params)
    ref_c, ref_d = reference_forward(prep, x, num_class)
    assert float(jnp.max(jnp.abs(class_logit - ref_c))) < 5e-2
    assert float(jnp.max(jnp.abs(temp_dom - ref_d))) < 5e-2

    print("KERNEL_OK")
</pallas_src>

<mosaic_0001>
module attributes {stable_mosaic.version = 11 : i64} {
  func.func @_fused_forward_kernel(%arg0: memref<10x1024xf32, #tpu.memory_space<vmem>>, %arg1: memref<2x10xbf16, #tpu.memory_space<vmem>>, %arg2: memref<1024x512xi8, #tpu.memory_space<vmem>>, %arg3: memref<10x512xf32, #tpu.memory_space<vmem>>, %arg4: memref<10x512xf32, #tpu.memory_space<vmem>>, %arg5: memref<512x512xi8, #tpu.memory_space<vmem>>, %arg6: memref<10x512xf32, #tpu.memory_space<vmem>>, %arg7: memref<10x512xf32, #tpu.memory_space<vmem>>, %arg8: memref<512x640xi8, #tpu.memory_space<vmem>>, %arg9: memref<1x640xf32, #tpu.memory_space<vmem>>, %arg10: memref<1x640xf32, #tpu.memory_space<vmem>>, %arg11: memref<512x2xbf16, #tpu.memory_space<vmem>>, %arg12: memref<1x2xf32, #tpu.memory_space<vmem>>, %arg13: memref<2x8xf32, #tpu.memory_space<vmem>>, %arg14: memref<2x2xf32, #tpu.memory_space<vmem>>) attributes {dimension_semantics = [], scalar_prefetch = 0 : i64, scratch_operands = 0 : i64, tpu.core_type = #tpu.core_type<tc>} {
    %c0 = arith.constant 0 : index
    %c0_0 = arith.constant 0 : index
    %0 = vector.load %arg0[%c0, %c0_0] : memref<10x1024xf32, #tpu.memory_space<vmem>>, vector<10x1024xf32>
    %1 = arith.truncf %0 : vector<10x1024xf32> to vector<10x1024xbf16>
    %c0_1 = arith.constant 0 : index
    %c0_2 = arith.constant 0 : index
    %2 = vector.load %arg2[%c0_1, %c0_2] : memref<1024x512xi8, #tpu.memory_space<vmem>>, vector<1024x512xi8>
    %3 = arith.sitofp %2 : vector<1024x512xi8> to vector<1024x512xf32>
    %4 = arith.truncf %3 : vector<1024x512xf32> to vector<1024x512xbf16>
    %cst = arith.constant dense<0.000000e+00> : vector<10x512xf32>
    %5 = tpu.matmul %1, %4, %cst {dimension_numbers = #tpu.dot_dimension_numbers<[1], [0], [0], [1], [0, 0, 1, 1], [], []>} : vector<10x1024xbf16>, vector<1024x512xbf16>, vector<10x512xf32> -> vector<10x512xf32>
    %c0_3 = arith.constant 0 : index
    %c0_4 = arith.constant 0 : index
    %6 = vector.load %arg3[%c0_3, %c0_4] : memref<10x512xf32, #tpu.memory_space<vmem>>, vector<10x512xf32>
    %7 = arith.mulf %5, %6 : vector<10x512xf32>
    %c0_5 = arith.constant 0 : index
    %c0_6 = arith.constant 0 : index
    %8 = vector.load %arg4[%c0_5, %c0_6] : memref<10x512xf32, #tpu.memory_space<vmem>>, vector<10x512xf32>
    %9 = arith.addf %7, %8 : vector<10x512xf32>
    %cst_7 = arith.constant 0.000000e+00 : f32
    %10 = vector.broadcast %cst_7 : f32 to vector<10x512xf32>
    %11 = arith.maximumf %9, %10 : vector<10x512xf32>
    %12 = arith.truncf %11 : vector<10x512xf32> to vector<10x512xbf16>
    %c0_8 = arith.constant 0 : index
    %c0_9 = arith.constant 0 : index
    %13 = vector.load %arg5[%c0_8, %c0_9] : memref<512x512xi8, #tpu.memory_space<vmem>>, vector<512x512xi8>
    %14 = arith.sitofp %13 : vector<512x512xi8> to vector<512x512xf32>
    %15 = arith.truncf %14 : vector<512x512xf32> to vector<512x512xbf16>
    %cst_10 = arith.constant dense<0.000000e+00> : vector<10x512xf32>
    %16 = tpu.matmul %12, %15, %cst_10 {dimension_numbers = #tpu.dot_dimension_numbers<[1], [0], [0], [1], [0, 0, 1, 1], [], []>} : vector<10x512xbf16>, vector<512x512xbf16>, vector<10x512xf32> -> vector<10x512xf32>
    %c0_11 = arith.constant 0 : index
    %c0_12 = arith.constant 0 : index
    %17 = vector.load %arg6[%c0_11, %c0_12] : memref<10x512xf32, #tpu.memory_space<vmem>>, vector<10x512xf32>
    %18 = arith.mulf %16, %17 : vector<10x512xf32>
    %c0_13 = arith.constant 0 : index
    %c0_14 = arith.constant 0 : index
    %19 = vector.load %arg7[%c0_13, %c0_14] : memref<10x512xf32, #tpu.memory_space<vmem>>, vector<10x512xf32>
    %20 = arith.addf %18, %19 : vector<10x512xf32>
    %cst_15 = arith.constant 0.000000e+00 : f32
    %21 = vector.broadcast %cst_15 : f32 to vector<10x512xf32>
    %22 = arith.maximumf %20, %21 : vector<10x512xf32>
    %23 = arith.truncf %22 : vector<10x512xf32> to vector<10x512xbf16>
    %c0_16 = arith.constant 0 : index
    %c0_17 = arith.constant 0 : index
    %24 = vector.load %arg1[%c0_16, %c0_17] : memref<2x10xbf16, #tpu.memory_space<vmem>>, vector<2x10xbf16>
    %cst_18 = arith.constant dense<0.000000e+00> : vector<2x512xf32>
    %25 = tpu.matmul %24, %23, %cst_18 {dimension_numbers = #tpu.dot_dimension_numbers<[1], [0], [0], [1], [0, 0, 1, 1], [], []>} : vector<2x10xbf16>, vector<10x512xbf16>, vector<2x512xf32> -> vector<2x512xf32>
    %cst_19 = arith.constant 2.000000e-01 : f32
    %26 = vector.broadcast %cst_19 : f32 to vector<2x512xf32>
    %27 = arith.mulf %25, %26 : vector<2x512xf32>
    %28 = arith.truncf %27 : vector<2x512xf32> to vector<2x512xbf16>
    %c0_20 = arith.constant 0 : index
    %c0_21 = arith.constant 0 : index
    %29 = vector.load %arg8[%c0_20, %c0_21] : memref<512x640xi8, #tpu.memory_space<vmem>>, vector<512x640xi8>
    %30 = arith.sitofp %29 : vector<512x640xi8> to vector<512x640xf32>
    %31 = arith.truncf %30 : vector<512x640xf32> to vector<512x640xbf16>
    %cst_22 = arith.constant dense<0.000000e+00> : vector<2x640xf32>
    %32 = tpu.matmul %28, %31, %cst_22 {dimension_numbers = #tpu.dot_dimension_numbers<[1], [0], [0], [1], [0, 0, 1, 1], [], []>} : vector<2x512xbf16>, vector<512x640xbf16>, vector<2x640xf32> -> vector<2x640xf32>
    %c0_23 = arith.constant 0 : index
    %c0_24 = arith.constant 0 : index
    %33 = vector.load %arg9[%c0_23, %c0_24] : memref<1x640xf32, #tpu.memory_space<vmem>>, vector<1x640xf32>
    %34 = vector.broadcast %33 : vector<1x640xf32> to vector<2x640xf32>
    %35 = arith.mulf %32, %34 : vector<2x640xf32>
    %c0_25 = arith.constant 0 : index
    %c0_26 = arith.constant 0 : index
    %36 = vector.load %arg10[%c0_25, %c0_26] : memref<1x640xf32, #tpu.memory_space<vmem>>, vector<1x640xf32>
    %37 = vector.broadcast %36 : vector<1x640xf32> to vector<2x640xf32>
    %38 = arith.addf %35, %37 : vector<2x640xf32>
    %39 = vector.extract_strided_slice %38 {offsets = [0, 0], sizes = [2, 512], strides = [1, 1]} : vector<2x640xf32> to vector<2x512xf32>
    %cst_27 = arith.constant 0.000000e+00 : f32
    %40 = vector.broadcast %cst_27 : f32 to vector<2x512xf32>
    %41 = arith.maximumf %39, %40 : vector<2x512xf32>
    %42 = arith.truncf %41 : vector<2x512xf32> to vector<2x512xbf16>
    %c0_28 = arith.constant 0 : index
    %c0_29 = arith.constant 0 : index
    %43 = vector.load %arg11[%c0_28, %c0_29] : memref<512x2xbf16, #tpu.memory_space<vmem>>, vector<512x2xbf16>
    %cst_30 = arith.constant dense<0.000000e+00> : vector<2x2xf32>
    %44 = tpu.matmul %42, %43, %cst_30 {dimension_numbers = #tpu.dot_dimension_numbers<[1], [0], [0], [1], [0, 0, 1, 1], [], []>} : vector<2x512xbf16>, vector<512x2xbf16>, vector<2x2xf32> -> vector<2x2xf32>
    %c0_31 = arith.constant 0 : index
    %c0_32 = arith.constant 0 : index
    %45 = vector.load %arg12[%c0_31, %c0_32] : memref<1x2xf32, #tpu.memory_space<vmem>>, vector<1x2xf32>
    %46 = vector.broadcast %45 : vector<1x2xf32> to vector<2x2xf32>
    %47 = arith.addf %44, %46 : vector<2x2xf32>
    %cst_33 = arith.constant dense<0xFF800000> : vector<2xf32>
    %48 = vector.multi_reduction <maximumf>, %47, %cst_33 [1] : vector<2x2xf32> to vector<2xf32>
    %49 = vector.shape_cast %48 : vector<2xf32> to vector<2x1xf32>
    %50 = vector.broadcast %49 : vector<2x1xf32> to vector<2x2xf32>
    %51 = arith.subf %47, %50 : vector<2x2xf32>
    %52 = math.exp %51 : vector<2x2xf32>
    %cst_34 = arith.constant dense<0.000000e+00> : vector<2xf32>
    %53 = vector.multi_reduction <add>, %52, %cst_34 [1] : vector<2x2xf32> to vector<2xf32>
    %54 = vector.shape_cast %53 : vector<2xf32> to vector<2x1xf32>
    %55 = math.log %54 : vector<2x1xf32>
    %56 = vector.broadcast %55 : vector<2x1xf32> to vector<2x2xf32>
    %57 = arith.subf %51, %56 : vector<2x2xf32>
    %c0_35 = arith.constant 0 : index
    %c0_36 = arith.constant 0 : index
    %58 = vector.load %arg14[%c0_35, %c0_36] : memref<2x2xf32, #tpu.memory_space<vmem>>, vector<2x2xf32>
    tpu.vector_store %arg14[%c0_35, %c0_36], %57 {strides = array<i32>} : memref<2x2xf32, #tpu.memory_space<vmem>>, vector<2x2xf32>,
    %59 = vector.extract_strided_slice %38 {offsets = [0, 512], sizes = [2, 8], strides = [1, 1]} : vector<2x640xf32> to vector<2x8xf32>
    %cst_37 = arith.constant dense<0xFF800000> : vector<2xf32>
    %60 = vector.multi_reduction <maximumf>, %59, %cst_37 [1] : vector<2x8xf32> to vector<2xf32>
    %61 = vector.shape_cast %60 : vector<2xf32> to vector<2x1xf32>
    %62 = vector.broadcast %61 : vector<2x1xf32> to vector<2x8xf32>
    %63 = arith.subf %59, %62 : vector<2x8xf32>
    %64 = math.exp %63 : vector<2x8xf32>
    %cst_38 = arith.constant dense<0.000000e+00> : vector<2xf32>
    %65 = vector.multi_reduction <add>, %64, %cst_38 [1] : vector<2x8xf32> to vector<2xf32>
    %66 = vector.shape_cast %65 : vector<2xf32> to vector<2x1xf32>
    %67 = math.log %66 : vector<2x1xf32>
    %68 = vector.broadcast %67 : vector<2x1xf32> to vector<2x8xf32>
    %69 = arith.subf %63, %68 : vector<2x8xf32>
    %c0_39 = arith.constant 0 : index
    %c0_40 = arith.constant 0 : index
    %70 = vector.load %arg13[%c0_39, %c0_40] : memref<2x8xf32, #tpu.memory_space<vmem>>, vector<2x8xf32>
    tpu.vector_store %arg13[%c0_39, %c0_40], %69 {strides = array<i32>} : memref<2x8xf32, #tpu.memory_space<vmem>>, vector<2x8xf32>,
    return
  }
}

</mosaic_0001>

<llo_original>
// kernel: _lambda_.1
$region0: #{_lambda_.1}
  #allocation0 [shape = 'u32[]', space=smem, size = 0x4, offset = 0x4, fixed_abs, tag = 'smem constant byte address 0x4 - core index']
  #allocation1 [shape = 'u32[144,128]{1,0:T(1,128)}', space=vmem, size = 0x12000, scoped, tag = 'internal scratch']
  %s0 = inlined_call_operand.vmem [shape: f32[10,1024], index: 0, kind: input, shape index: {}]
  %s1 = inlined_call_operand.vmem [shape: bf16[2,10], index: 1, kind: input, shape index: {}]
  %s2 = inlined_call_operand.hbm [shape: s8[1024,512], index: 2, kind: input, shape index: {}]
  %s3 = inlined_call_operand.vmem [shape: f32[10,512], index: 3, kind: input, shape index: {}]
  %s4 = inlined_call_operand.hbm [shape: f32[10,512], index: 4, kind: input, shape index: {}]
  %s5 = inlined_call_operand.hbm [shape: s8[512,512], index: 5, kind: input, shape index: {}]
  %s6 = inlined_call_operand.hbm [shape: f32[10,512], index: 6, kind: input, shape index: {}]
  %s7 = inlined_call_operand.hbm [shape: f32[10,512], index: 7, kind: input, shape index: {}]
  %s8 = inlined_call_operand.vmem [shape: s8[512,640], index: 8, kind: input, shape index: {}]
  %s9 = inlined_call_operand.vmem [shape: f32[1,640], index: 9, kind: input, shape index: {}]
  %s10 = inlined_call_operand.vmem [shape: f32[1,640], index: 10, kind: input, shape index: {}]
  %s11 = inlined_call_operand.vmem [shape: bf16[512,2], index: 11, kind: input, shape index: {}]
  %s12 = inlined_call_operand.vmem [shape: f32[1,2], index: 12, kind: input, shape index: {}]
  %s13 = inlined_call_operand.hbm [shape: f32[2,8], index: 13, kind: output, shape index: {0}]
  %s14 = inlined_call_operand.hbm [shape: f32[2,2], index: 14, kind: output, shape index: {1}]
  %15 = xla_tuple %s13, %s14
  %s16 = sld [smem:[#allocation0]]
  $region90: #{_lambda_.1} parent=0
    _
  %s18 = ssub.s32 1, %s16
  %s19 = scalar_select 0, %s18, %s16
  $region1: #{_lambda_.1} parent=0
    #allocation2 [shape = 'u8[524288]{0}', space=vmem, size = 0x80000, scoped, tag = 'input window, operand 2, single buffered']
    #allocation3 [shape = 's32[1]{0}', space=sflag, size = 0x4, scoped, tag = 'scoped memory for _lambda_.1']
    #allocation4 [shape = 's32[1]{0}', space=sflag, size = 0x4, scoped, tag = 'scoped memory for _lambda_.1']
    #allocation5 [shape = 'u8[32768]{0}', space=vmem, size = 0x8000, scoped, tag = 'input window, operand 4, single buffered']
    #allocation6 [shape = 's32[1]{0}', space=sflag, size = 0x4, scoped, tag = 'scoped memory for _lambda_.1']
    #allocation7 [shape = 'u8[262144]{0}', space=vmem, size = 0x40000, scoped, tag = 'input window, operand 5, single buffered']
    #allocation8 [shape = 'u8[32768]{0}', space=vmem, size = 0x8000, scoped, tag = 'input window, operand 6, single buffered']
    #allocation9 [shape = 's32[1]{0}', space=sflag, size = 0x4, scoped, tag = 'scoped memory for _lambda_.1']
    #allocation10 [shape = 'u8[32768]{0}', space=vmem, size = 0x8000, scoped, tag = 'input window, operand 7, single buffered']
    #allocation11 [shape = 'u8[1024]{0}', space=vmem, size = 0x400, scoped, tag = 'output window, operand 0, single buffered']
    #allocation12 [shape = 'u8[1024]{0}', space=vmem, size = 0x400, scoped, tag = 'output window, operand 1, single buffered']
    #allocation13 [shape = 's32[1]{0}', space=sflag, size = 0x4, scoped, tag = 'scoped memory for _lambda_.1']
    %20 = vsyncpa [#allocation3], 0
    %21 = vsyncpa [#allocation6], 0
    %22 = vsyncpa [#allocation9], 0
    %23 = vsyncpa [#allocation4], 0
    %24 = vsyncpa [#allocation13], 0
    // Predicated region
    $region2: #{_lambda_.1} parent=1 // pred_check
      _
    $region3: #{_lambda_.1} parent=1 // pred_check_branch
      %26 = sbr.rel (0) target = $region5
    $region4: #{_lambda_.1} parent=1 // pred_region
      _
    $region5: #{_lambda_.1} parent=1 // pred_fallthru
      _
    // Predicated region
    $region6: #{_lambda_.1} parent=1 // pred_check
      _
    $region7: #{_lambda_.1} parent=1 // pred_check_branch
      %28 = sbr.rel (0) target = $region9
    $region8: #{_lambda_.1} parent=1 // pred_region
      _
    $region9: #{_lambda_.1} parent=1 // pred_fallthru
      _
    // Predicated region
    $region10: #{_lambda_.1} parent=1 // pred_check
      _
    $region11: #{_lambda_.1} parent=1 // pred_check_branch
      %30 = sbr.rel (0) target = $region13
    $region12: #{_lambda_.1} parent=1 // pred_region
      %s32 = ssub.s32 16384, 16384
      %33 = vsyncadd [#allocation3], %s32
      %s34 = sshll.u32 [#allocation2], 4
      %s35 = int_to_ptr.vmem [resolvable:$true] %s34
      %40 = dma.hbm_to_vmem [thread:$0]  %s2, 16384, %s35, [#allocation3], 512, 512, 32
    $region13: #{_lambda_.1} parent=1 // pred_fallthru
      _
    // Predicated region
    $region14: #{_lambda_.1} parent=1 // pred_check
      _
    $region15: #{_lambda_.1} parent=1 // pred_check_branch
      %42 = sbr.rel (0) target = $region17
    $region16: #{_lambda_.1} parent=1 // pred_region
      _
    $region17: #{_lambda_.1} parent=1 // pred_fallthru
      _
    // Predicated region
    $region18: #{_lambda_.1} parent=1 // pred_check
      _
    $region19: #{_lambda_.1} parent=1 // pred_check_branch
      %44 = sbr.rel (0) target = $region21
    $region20: #{_lambda_.1} parent=1 // pred_region
      %s46 = ssub.s32 1024, 1024
      %47 = vsyncadd [#allocation6], %s46
      %s48 = sshll.u32 [#allocation5], 4
      %s49 = int_to_ptr.vmem [resolvable:$true] %s48
      %54 = dma.hbm_to_vmem [thread:$0]  %s4, 1024, %s49, [#allocation6], 512, 512, 32
    $region21: #{_lambda_.1} parent=1 // pred_fallthru
      _
    // Predicated region
    $region22: #{_lambda_.1} parent=1 // pred_check
      _
    $region23: #{_lambda_.1} parent=1 // pred_check_branch
      %56 = sbr.rel (0) target = $region25
    $region24: #{_lambda_.1} parent=1 // pred_region
      %s58 = ssub.s32 8192, 8192
      %59 = vsyncadd [#allocation6], %s58
      %s60 = sshll.u32 [#allocation7], 4
      %s61 = int_to_ptr.vmem [resolvable:$true] %s60
      %66 = dma.hbm_to_vmem [thread:$0]  %s5, 8192, %s61, [#allocation6], 512, 512, 32
    $region25: #{_lambda_.1} parent=1 // pred_fallthru
      _
    // Predicated region
    $region26: #{_lambda_.1} parent=1 // pred_check
      _
    $region27: #{_lambda_.1} parent=1 // pred_check_branch
      %68 = sbr.rel (0) target = $region29
    $region28: #{_lambda_.1} parent=1 // pred_region
      %s70 = ssub.s32 1024, 1024
      %71 = vsyncadd [#allocation9], %s70
      %s72 = sshll.u32 [#allocation8], 4
      %s73 = int_to_ptr.vmem [resolvable:$true] %s72
      %78 = dma.hbm_to_vmem [thread:$0]  %s6, 1024, %s73, [#allocation9], 512, 512, 32
    $region29: #{_lambda_.1} parent=1 // pred_fallthru
      _
    // Predicated region
    $region30: #{_lambda_.1} parent=1 // pred_check
      _
    $region31: #{_lambda_.1} parent=1 // pred_check_branch
      %80 = sbr.rel (0) target = $region33
    $region32: #{_lambda_.1} parent=1 // pred_region
      %s82 = ssub.s32 1024, 1024
      %83 = vsyncadd [#allocation9], %s82
      %s84 = sshll.u32 [#allocation10], 4
      %s85 = int_to_ptr.vmem [resolvable:$true] %s84
      %90 = dma.hbm_to_vmem [thread:$0]  %s7, 1024, %s85, [#allocation9], 512, 512, 32
    $region33: #{_lambda_.1} parent=1 // pred_fallthru
      _
    // Predicated region
    $region34: #{_lambda_.1} parent=1 // pred_check
      _
    $region35: #{_lambda_.1} parent=1 // pred_check_branch
      %92 = sbr.rel (0) target = $region37
    $region36: #{_lambda_.1} parent=1 // pred_region
      _
    $region37: #{_lambda_.1} parent=1 // pred_fallthru
      _
    // Predicated region
    $region38: #{_lambda_.1} parent=1 // pred_check
      _
    $region39: #{_lambda_.1} parent=1 // pred_check_branch
      %94 = sbr.rel (0) target = $region41
    $region40: #{_lambda_.1} parent=1 // pred_region
      _
    $region41: #{_lambda_.1} parent=1 // pred_fallthru
      _
    // Predicated region
    $region42: #{_lambda_.1} parent=1 // pred_check
      _
    $region43: #{_lambda_.1} parent=1 // pred_check_branch
      %96 = sbr.rel (0) target = $region45
    $region44: #{_lambda_.1} parent=1 // pred_region
      _
    $region45: #{_lambda_.1} parent=1 // pred_fallthru
      _
    // Predicated region
    $region46: #{_lambda_.1} parent=1 // pred_check
      _
    $region47: #{_lambda_.1} parent=1 // pred_check_branch
      %98 = sbr.rel (0) target = $region49
    $region48: #{_lambda_.1} parent=1 // pred_region
      _
    $region49: #{_lambda_.1} parent=1 // pred_fallthru
      _
    // Predicated region
    $region50: #{_lambda_.1} parent=1 // pred_check
      _
    $region51: #{_lambda_.1} parent=1 // pred_check_branch
      %100 = sbr.rel (0) target = $region53
    $region52: #{_lambda_.1} parent=1 // pred_region
      _
    $region53: #{_lambda_.1} parent=1 // pred_fallthru
      _
    // Predicated region
    $region54: #{_lambda_.1} parent=1 // pred_check
      _
    $region55: #{_lambda_.1} parent=1 // pred_check_branch
      %102 = sbr.rel (0) target = $region57
    $region56: #{_lambda_.1} parent=1 // pred_region
      %103 = dma.done [#allocation3], 16384
    $region57: #{_lambda_.1} parent=1 // pred_fallthru
      _
    // Predicated region
    $region58: #{_lambda_.1} parent=1 // pred_check
      _
    $region59: #{_lambda_.1} parent=1 // pred_check_branch
      %105 = sbr.rel (0) target = $region61
    $region60: #{_lambda_.1} parent=1 // pred_region
      %106 = dma.done [#allocation6], 1024
    $region61: #{_lambda_.1} parent=1 // pred_fallthru
      _
    // Predicated region
    $region62: #{_lambda_.1} parent=1 // pred_check
      _
    $region63: #{_lambda_.1} parent=1 // pred_check_branch
      %108 = sbr.rel (0) target = $region65
    $region64: #{_lambda_.1} parent=1 // pred_region
      %109 = dma.done [#allocation6], 8192
    $region65: #{_lambda_.1} parent=1 // pred_fallthru
      _
    // Predicated region
    $region66: #{_lambda_.1} parent=1 // pred_check
      _
    $region67: #{_lambda_.1} parent=1 // pred_check_branch
      %111 = sbr.rel (0) target = $region69
    $region68: #{_lambda_.1} parent=1 // pred_region
      %112 = dma.done [#allocation9], 1024
    $region69: #{_lambda_.1} parent=1 // pred_fallthru
      _
    // Predicated region
    $region70: #{_lambda_.1} parent=1 // pred_check
      _
    $region71: #{_lambda_.1} parent=1 // pred_check_branch
      %114 = sbr.rel (0) target = $region73
    $region72: #{_lambda_.1} parent=1 // pred_region
      %115 = dma.done [#allocation9], 1024
    $region73: #{_lambda_.1} parent=1 // pred_fallthru
      _
    %v117 = vld [vmem:[%s0] sm:$0xff]
    %v118 = vld [vmem:[%s0 + $0x8] sm:$0xff]
    %v119 = vld [vmem:[%s0 + $0x10] sm:$0xff]
    %v120 = vld [vmem:[%s0 + $0x18] sm:$0xff]
    %v121 = vld [vmem:[%s0 + $0x20] sm:$0xff]
    %v122 = vld [vmem:[%s0 + $0x28] sm:$0xff]
    %v123 = vld [vmem:[%s0 + $0x30] sm:$0xff]
    %v124 = vld [vmem:[%s0 + $0x38] sm:$0xff]
    %v125 = vld [vmem:[%s0 + $0x40] sm:$0x3]
    %v126 = vld [vmem:[%s0 + $0x48] sm:$0x3]
    %v127 = vld [vmem:[%s0 + $0x50] sm:$0x3]
    %v128 = vld [vmem:[%s0 + $0x58] sm:$0x3]
    %v129 = vld [vmem:[%s0 + $0x60] sm:$0x3]
    %v130 = vld [vmem:[%s0 + $0x68] sm:$0x3]
    %v131 = vld [vmem:[%s0 + $0x70] sm:$0x3]
    %v132 = vld [vmem:[%s0 + $0x78] sm:$0x3]
    %v133 = vpack.c.bf16 %v125, %v117
    %v134 = vpack.c.bf16 %v126, %v118
    %v135 = vpack.c.bf16 %v127, %v119
    %v136 = vpack.c.bf16 %v128, %v120
    %v137 = vpack.c.bf16 %v129, %v121
    %v138 = vpack.c.bf16 %v130, %v122
    %v139 = vpack.c.bf16 %v131, %v123
    %v140 = vpack.c.bf16 %v132, %v124
    %v141 = vld [vmem:[#allocation2] sm:$0xff]
    %v142 = vld [vmem:[#allocation2 + $0x8] sm:$0xff]
    %v143 = vld [vmem:[#allocation2 + $0x10] sm:$0xff]
    %v144 = vld [vmem:[#allocation2 + $0x18] sm:$0xff]
    %v145 = vld [vmem:[#allocation2 + $0x20] sm:$0xff]
    %v146 = vld [vmem:[#allocation2 + $0x28] sm:$0xff]
    %v147 = vld [vmem:[#allocation2 + $0x30] sm:$0xff]
    %v148 = vld [vmem:[#allocation2 + $0x38] sm:$0xff]
    %v149 = vld [vmem:[#allocation2 + $0x40] sm:$0xff]
    %v150 = vld [vmem:[#allocation2 + $0x48] sm:$0xff]
    %v151 = vld [vmem:[#allocation2 + $0x50] sm:$0xff]
    %v152 = vld [vmem:[#allocation2 + $0x58] sm:$0xff]
    %v153 = vld [vmem:[#allocation2 + $0x60] sm:$0xff]
    %v154 = vld [vmem:[#allocation2 + $0x68] sm:$0xff]
    %v155 = vld [vmem:[#allocation2 + $0x70] sm:$0xff]
    %v156 = vld [vmem:[#allocation2 + $0x78] sm:$0xff]
    %v157 = vld [vmem:[#allocation2 + $0x80] sm:$0xff]
    %v158 = vld [vmem:[#allocation2 + $0x88] sm:$0xff]
    %v159 = vld [vmem:[#allocation2 + $0x90] sm:$0xff]
    %v160 = vld [vmem:[#allocation2 + $0x98] sm:$0xff]
    %v161 = vld [vmem:[#allocation2 + $0xa0] sm:$0xff]
    %v162 = vld [vmem:[#allocation2 + $0xa8] sm:$0xff]
    %v163 = vld [vmem:[#allocation2 + $0xb0] sm:$0xff]
    %v164 = vld [vmem:[#allocation2 + $0xb8] sm:$0xff]
    %v165 = vld [vmem:[#allocation2 + $0xc0] sm:$0xff]
    %v166 = vld [vmem:[#allocation2 + $0xc8] sm:$0xff]
    %v167 = vld [vmem:[#allocation2 + $0xd0] sm:$0xff]
    %v168 = vld [vmem:[#allocation2 + $0xd8] sm:$0xff]
    %v169 = vld [vmem:[#allocation2 + $0xe0] sm:$0xff]
    %v170 = vld [vmem:[#allocation2 + $0xe8] sm:$0xff]
    %v171 = vld [vmem:[#allocation2 + $0xf0] sm:$0xff]
    %v172 = vld [vmem:[#allocation2 + $0xf8] sm:$0xff]
    %v173 = vld [vmem:[#allocation2 + $0x100] sm:$0xff]
    %v174 = vld [vmem:[#allocation2 + $0x108] sm:$0xff]
    %v175 = vld [vmem:[#allocation2 + $0x110] sm:$0xff]
    %v176 = vld [vmem:[#allocation2 + $0x118] sm:$0xff]
    %v177 = vld [vmem:[#allocation2 + $0x120] sm:$0xff]
    %v178 = vld [vmem:[#allocation2 + $0x128] sm:$0xff]
    %v179 = vld [vmem:[#allocation2 + $0x130] sm:$0xff]
    %v180 = vld [vmem:[#allocation2 + $0x138] sm:$0xff]
    %v181 = vld [vmem:[#allocation2 + $0x140] sm:$0xff]
    %v182 = vld [vmem:[#allocation2 + $0x148] sm:$0xff]
    %v183 = vld [vmem:[#allocation2 + $0x150] sm:$0xff]
    %v184 = vld [vmem:[#allocation2 + $0x158] sm:$0xff]
    %v185 = vld [vmem:[#allocation2 + $0x160] sm:$0xff]
    %v186 = vld [vmem:[#allocation2 + $0x168] sm:$0xff]
    %v187 = vld [vmem:[#allocation2 + $0x170] sm:$0xff]
    %v188 = vld [vmem:[#allocation2 + $0x178] sm:$0xff]
    %v189 = vld [vmem:[#allocation2 + $0x180] sm:$0xff]
    %v190 = vld [vmem:[#allocation2 + $0x188] sm:$0xff]
    %v191 = vld [vmem:[#allocation2 + $0x190] sm:$0xff]
    %v192 = vld [vmem:[#allocation2 + $0x198] sm:$0xff]
    %v193 = vld [vmem:[#allocation2 + $0x1a0] sm:$0xff]
    %v194 = vld [vmem:[#allocation2 + $0x1a8] sm:$0xff]
    %v195 = vld [vmem:[#allocation2 + $0x1b0] sm:$0xff]
    %v196 = vld [vmem:[#allocation2 + $0x1b8] sm:$0xff]
    %v197 = vld [vmem:[#allocation2 + $0x1c0] sm:$0xff]
    %v198 = vld [vmem:[#allocation2 + $0x1c8] sm:$0xff]
    %v199 = vld [vmem:[#allocation2 + $0x1d0] sm:$0xff]
    %v200 = vld [vmem:[#allocation2 + $0x1d8] sm:$0xff]
    %v201 = vld [vmem:[#allocation2 + $0x1e0] sm:$0xff]
    %v202 = vld [vmem:[#allocation2 + $0x1e8] sm:$0xff]
    %v203 = vld [vmem:[#allocation2 + $0x1f0] sm:$0xff]
    %v204 = vld [vmem:[#allocation2 + $0x1f8] sm:$0xff]
    %v205 = vld [vmem:[#allocation2 + $0x200] sm:$0xff]
    %v206 = vld [vmem:[#allocation2 + $0x208] sm:$0xff]
    %v207 = vld [vmem:[#allocation2 + $0x210] sm:$0xff]
    %v208 = vld [vmem:[#allocation2 + $0x218] sm:$0xff]
    %v209 = vld [vmem:[#allocation2 + $0x220] sm:$0xff]
    %v210 = vld [vmem:[#allocation2 + $0x228] sm:$0xff]
    %v211 = vld [vmem:[#allocation2 + $0x230] sm:$0xff]
    %v212 = vld [vmem:[#allocation2 + $0x238] sm:$0xff]
    %v213 = vld [vmem:[#allocation2 + $0x240] sm:$0xff]
    %v214 = vld [vmem:[#allocation2 + $0x248] sm:$0xff]
    %v215 = vld [vmem:[#allocation2 + $0x250] sm:$0xff]
    %v216 = vld [vmem:[#allocation2 + $0x258] sm:$0xff]
    %v217 = vld [vmem:[#allocation2 + $0x260] sm:$0xff]
    %v218 = vld [vmem:[#allocation2 + $0x268] sm:$0xff]
    %v219 = vld [vmem:[#allocation2 + $0x270] sm:$0xff]
    %v220 = vld [vmem:[#allocation2 + $0x278] sm:$0xff]
    %v221 = vld [vmem:[#allocation2 + $0x280] sm:$0xff]
    %v222 = vld [vmem:[#allocation2 + $0x288] sm:$0xff]
    %v223 = vld [vmem:[#allocation2 + $0x290] sm:$0xff]
    %v224 = vld [vmem:[#allocation2 + $0x298] sm:$0xff]
    %v225 = vld [vmem:[#allocation2 + $0x2a0] sm:$0xff]
    %v226 = vld [vmem:[#allocation2 + $0x2a8] sm:$0xff]
    %v227 = vld [vmem:[#allocation2 + $0x2b0] sm:$0xff]
    %v228 = vld [vmem:[#allocation2 + $0x2b8] sm:$0xff]
    %v229 = vld [vmem:[#allocation2 + $0x2c0] sm:$0xff]
    %v230 = vld [vmem:[#allocation2 + $0x2c8] sm:$0xff]
    %v231 = vld [vmem:[#allocation2 + $0x2d0] sm:$0xff]
    %v232 = vld [vmem:[#allocation2 + $0x2d8] sm:$0xff]
    %v233 = vld [vmem:[#allocation2 + $0x2e0] sm:$0xff]
    %v234 = vld [vmem:[#allocation2 + $0x2e8] sm:$0xff]
    %v235 = vld [vmem:[#allocation2 + $0x2f0] sm:$0xff]
    %v236 = vld [vmem:[#allocation2 + $0x2f8] sm:$0xff]
    %v237 = vld [vmem:[#allocation2 + $0x300] sm:$0xff]
    %v238 = vld [vmem:[#allocation2 + $0x308] sm:$0xff]
    %v239 = vld [vmem:[#allocation2 + $0x310] sm:$0xff]
    %v240 = vld [vmem:[#allocation2 + $0x318] sm:$0xff]
    %v241 = vld [vmem:[#allocation2 + $0x320] sm:$0xff]
    %v242 = vld [vmem:[#allocation2 + $0x328] sm:$0xff]
    %v243 = vld [vmem:[#allocation2 + $0x330] sm:$0xff]
    %v244 = vld [vmem:[#allocation2 + $0x338] sm:$0xff]
    %v245 = vld [vmem:[#allocation2 + $0x340] sm:$0xff]
    %v246 = vld [vmem:[#allocation2 + $0x348] sm:$0xff]
    %v247 = vld [vmem:[#allocation2 + $0x350] sm:$0xff]
    %v248 = vld [vmem:[#allocation2 + $0x358] sm:$0xff]
    %v249 = vld [vmem:[#allocation2 + $0x360] sm:$0xff]
    %v250 = vld [vmem:[#allocation2 + $0x368] sm:$0xff]
    %v251 = vld [vmem:[#allocation2 + $0x370] sm:$0xff]
    %v252 = vld [vmem:[#allocation2 + $0x378] sm:$0xff]
    %v253 = vld [vmem:[#allocation2 + $0x380] sm:$0xff]
    %v254 = vld [vmem:[#allocation2 + $0x388] sm:$0xff]
    %v255 = vld [vmem:[#allocation2 + $0x390] sm:$0xff]
    %v256 = vld [vmem:[#allocation2 + $0x398] sm:$0xff]
    %v257 = vld [vmem:[#allocation2 + $0x3a0] sm:$0xff]
    %v258 = vld [vmem:[#allocation2 + $0x3a8] sm:$0xff]
    %v259 = vld [vmem:[#allocation2 + $0x3b0] sm:$0xff]
    %v260 = vld [vmem:[#allocation2 + $0x3b8] sm:$0xff]
    %v261 = vld [vmem:[#allocation2 + $0x3c0] sm:$0xff]
    %v262 = vld [vmem:[#allocation2 + $0x3c8] sm:$0xff]
    %v263 = vld [vmem:[#allocation2 + $0x3d0] sm:$0xff]
    %v264 = vld [vmem:[#allocation2 + $0x3d8] sm:$0xff]
    %v265 = vld [vmem:[#allocation2 + $0x3e0] sm:$0xff]
    %v266 = vld [vmem:[#allocation2 + $0x3e8] sm:$0xff]
    %v267 = vld [vmem:[#allocation2 + $0x3f0] sm:$0xff]
    %v268 = vld [vmem:[#allocation2 + $0x3f8] sm:$0xff]
    %v269 = vunpack.c.l.s8.bf16 %v141
    %v270 = vunpack.c.l.s8.bf16 %v142
    %v271 = vunpack.c.l.s8.bf16 %v143
    %v272 = vunpack.c.l.s8.bf16 %v144
    %v273 = vunpack.c.h.s8.bf16 %v141
    %v274 = vunpack.c.h.s8.bf16 %v142
    %v275 = vunpack.c.h.s8.bf16 %v143
    %v276 = vunpack.c.h.s8.bf16 %v144
    %v277 = vunpack.c.l.s8.bf16 %v145
    %v278 = vunpack.c.l.s8.bf16 %v146
    %v279 = vunpack.c.l.s8.bf16 %v147
    %v280 = vunpack.c.l.s8.bf16 %v148
    %v281 = vunpack.c.h.s8.bf16 %v145
    %v282 = vunpack.c.h.s8.bf16 %v146
    %v283 = vunpack.c.h.s8.bf16 %v147
    %v284 = vunpack.c.h.s8.bf16 %v148
    %v285 = vunpack.c.l.s8.bf16 %v149
    %v286 = vunpack.c.l.s8.bf16 %v150
    %v287 = vunpack.c.l.s8.bf16 %v151
    %v288 = vunpack.c.l.s8.bf16 %v152
    %v289 = vunpack.c.h.s8.bf16 %v149
    %v290 = vunpack.c.h.s8.bf16 %v150
    %v291 = vunpack.c.h.s8.bf16 %v151
    %v292 = vunpack.c.h.s8.bf16 %v152
    %v293 = vunpack.c.l.s8.bf16 %v153
    %v294 = vunpack.c.l.s8.bf16 %v154
    %v295 = vunpack.c.l.s8.bf16 %v155
    %v296 = vunpack.c.l.s8.bf16 %v156
    %v297 = vunpack.c.h.s8.bf16 %v153
    %v298 = vunpack.c.h.s8.bf16 %v154
    %v299 = vunpack.c.h.s8.bf16 %v155
    %v300 = vunpack.c.h.s8.bf16 %v156
    %v301 = vunpack.c.l.s8.bf16 %v157
    %v302 = vunpack.c.l.s8.bf16 %v158
    %v303 = vunpack.c.l.s8.bf16 %v159
    %v304 = vunpack.c.l.s8.bf16 %v160
    %v305 = vunpack.c.h.s8.bf16 %v157
    %v306 = vunpack.c.h.s8.bf16 %v158
    %v307 = vunpack.c.h.s8.bf16 %v159
    %v308 = vunpack.c.h.s8.bf16 %v160
    %v309 = vunpack.c.l.s8.bf16 %v161
    %v310 = vunpack.c.l.s8.bf16 %v162
    %v311 = vunpack.c.l.s8.bf16 %v163
    %v312 = vunpack.c.l.s8.bf16 %v164
    %v313 = vunpack.c.h.s8.bf16 %v161
    %v314 = vunpack.c.h.s8.bf16 %v162
    %v315 = vunpack.c.h.s8.bf16 %v163
    %v316 = vunpack.c.h.s8.bf16 %v164
    %v317 = vunpack.c.l.s8.bf16 %v165
    %v318 = vunpack.c.l.s8.bf16 %v166
    %v319 = vunpack.c.l.s8.bf16 %v167
    %v320 = vunpack.c.l.s8.bf16 %v168
    %v321 = vunpack.c.h.s8.bf16 %v165
    %v322 = vunpack.c.h.s8.bf16 %v166
    %v323 = vunpack.c.h.s8.bf16 %v167
    %v324 = vunpack.c.h.s8.bf16 %v168
    %v325 = vunpack.c.l.s8.bf16 %v169
    %v326 = vunpack.c.l.s8.bf16 %v170
    %v327 = vunpack.c.l.s8.bf16 %v171
    %v328 = vunpack.c.l.s8.bf16 %v172
    %v329 = vunpack.c.h.s8.bf16 %v169
    %v330 = vunpack.c.h.s8.bf16 %v170
    %v331 = vunpack.c.h.s8.bf16 %v171
    %v332 = vunpack.c.h.s8.bf16 %v172
    %v333 = vunpack.c.l.s8.bf16 %v173
    %v334 = vunpack.c.l.s8.bf16 %v174
    %v335 = vunpack.c.l.s8.bf16 %v175
    %v336 = vunpack.c.l.s8.bf16 %v176
    %v337 = vunpack.c.h.s8.bf16 %v173
    %v338 = vunpack.c.h.s8.bf16 %v174
    %v339 = vunpack.c.h.s8.bf16 %v175
    %v340 = vunpack.c.h.s8.bf16 %v176
    %v341 = vunpack.c.l.s8.bf16 %v177
    %v342 = vunpack.c.l.s8.bf16 %v178
    %v343 = vunpack.c.l.s8.bf16 %v179
    %v344 = vunpack.c.l.s8.bf16 %v180
    %v345 = vunpack.c.h.s8.bf16 %v177
    %v346 = vunpack.c.h.s8.bf16 %v178
    %v347 = vunpack.c.h.s8.bf16 %v179
    %v348 = vunpack.c.h.s8.bf16 %v180
    %v349 = vunpack.c.l.s8.bf16 %v181
    %v350 = vunpack.c.l.s8.bf16 %v182
    %v351 = vunpack.c.l.s8.bf16 %v183
    %v352 = vunpack.c.l.s8.bf16 %v184
    %v353 = vunpack.c.h.s8.bf16 %v181
    %v354 = vunpack.c.h.s8.bf16 %v182
    %v355 = vunpack.c.h.s8.bf16 %v183
    %v356 = vunpack.c.h.s8.bf16 %v184
    %v357 = vunpack.c.l.s8.bf16 %v185
    %v358 = vunpack.c.l.s8.bf16 %v186
    %v359 = vunpack.c.l.s8.bf16 %v187
    %v360 = vunpack.c.l.s8.bf16 %v188
    %v361 = vunpack.c.h.s8.bf16 %v185
    %v362 = vunpack.c.h.s8.bf16 %v186
    %v363 = vunpack.c.h.s8.bf16 %v187
    %v364 = vunpack.c.h.s8.bf16 %v188
    %v365 = vunpack.c.l.s8.bf16 %v189
    %v366 = vunpack.c.l.s8.bf16 %v190
    %v367 = vunpack.c.l.s8.bf16 %v191
    %v368 = vunpack.c.l.s8.bf16 %v192
    %v369 = vunpack.c.h.s8.bf16 %v189
    %v370 = vunpack.c.h.s8.bf16 %v190
    %v371 = vunpack.c.h.s8.bf16 %v191
    %v372 = vunpack.c.h.s8.bf16 %v192
    %v373 = vunpack.c.l.s8.bf16 %v193
    %v374 = vunpack.c.l.s8.bf16 %v194
    %v375 = vunpack.c.l.s8.bf16 %v195
    %v376 = vunpack.c.l.s8.bf16 %v196
    %v377 = vunpack.c.h.s8.bf16 %v193
    %v378 = vunpack.c.h.s8.bf16 %v194
    %v379 = vunpack.c.h.s8.bf16 %v195
    %v380 = vunpack.c.h.s8.bf16 %v196
    %v381 = vunpack.c.l.s8.bf16 %v197
    %v382 = vunpack.c.l.s8.bf16 %v198
    %v383 = vunpack.c.l.s8.bf16 %v199
    %v384 = vunpack.c.l.s8.bf16 %v200
    %v385 = vunpack.c.h.s8.bf16 %v197
    %v386 = vunpack.c.h.s8.bf16 %v198
    %v387 = vunpack.c.h.s8.bf16 %v199
    %v388 = vunpack.c.h.s8.bf16 %v200
    %v389 = vunpack.c.l.s8.bf16 %v201
    %v390 = vunpack.c.l.s8.bf16 %v202
    %v391 = vunpack.c.l.s8.bf16 %v203
    %v392 = vunpack.c.l.s8.bf16 %v204
    %v393 = vunpack.c.h.s8.bf16 %v201
    %v394 = vunpack.c.h.s8.bf16 %v202
    %v395 = vunpack.c.h.s8.bf16 %v203
    %v396 = vunpack.c.h.s8.bf16 %v204
    %v397 = vunpack.c.l.s8.bf16 %v205
    %v398 = vunpack.c.l.s8.bf16 %v206
    %v399 = vunpack.c.l.s8.bf16 %v207
    %v400 = vunpack.c.l.s8.bf16 %v208
    %v401 = vunpack.c.h.s8.bf16 %v205
    %v402 = vunpack.c.h.s8.bf16 %v206
    %v403 = vunpack.c.h.s8.bf16 %v207
    %v404 = vunpack.c.h.s8.bf16 %v208
    %v405 = vunpack.c.l.s8.bf16 %v209
    %v406 = vunpack.c.l.s8.bf16 %v210
    %v407 = vunpack.c.l.s8.bf16 %v211
    %v408 = vunpack.c.l.s8.bf16 %v212
    %v409 = vunpack.c.h.s8.bf16 %v209
    %v410 = vunpack.c.h.s8.bf16 %v210
    %v411 = vunpack.c.h.s8.bf16 %v211
    %v412 = vunpack.c.h.s8.bf16 %v212
    %v413 = vunpack.c.l.s8.bf16 %v213
    %v414 = vunpack.c.l.s8.bf16 %v214
    %v415 = vunpack.c.l.s8.bf16 %v215
    %v416 = vunpack.c.l.s8.bf16 %v216
    %v417 = vunpack.c.h.s8.bf16 %v213
    %v418 = vunpack.c.h.s8.bf16 %v214
    %v419 = vunpack.c.h.s8.bf16 %v215
    %v420 = vunpack.c.h.s8.bf16 %v216
    %v421 = vunpack.c.l.s8.bf16 %v217
    %v422 = vunpack.c.l.s8.bf16 %v218
    %v423 = vunpack.c.l.s8.bf16 %v219
    %v424 = vunpack.c.l.s8.bf16 %v220
    %v425 = vunpack.c.h.s8.bf16 %v217
    %v426 = vunpack.c.h.s8.bf16 %v218
    %v427 = vunpack.c.h.s8.bf16 %v219
    %v428 = vunpack.c.h.s8.bf16 %v220
    %v429 = vunpack.c.l.s8.bf16 %v221
    %v430 = vunpack.c.l.s8.bf16 %v222
    %v431 = vunpack.c.l.s8.bf16 %v223
    %v432 = vunpack.c.l.s8.bf16 %v224
    %v433 = vunpack.c.h.s8.bf16 %v221
    %v434 = vunpack.c.h.s8.bf16 %v222
    %v435 = vunpack.c.h.s8.bf16 %v223
    %v436 = vunpack.c.h.s8.bf16 %v224
    %v437 = vunpack.c.l.s8.bf16 %v225
    %v438 = vunpack.c.l.s8.bf16 %v226
    %v439 = vunpack.c.l.s8.bf16 %v227
    %v440 = vunpack.c.l.s8.bf16 %v228
    %v441 = vunpack.c.h.s8.bf16 %v225
    %v442 = vunpack.c.h.s8.bf16 %v226
    %v443 = vunpack.c.h.s8.bf16 %v227
    %v444 = vunpack.c.h.s8.bf16 %v228
    %v445 = vunpack.c.l.s8.bf16 %v229
    %v446 = vunpack.c.l.s8.bf16 %v230
    %v447 = vunpack.c.l.s8.bf16 %v231
    %v448 = vunpack.c.l.s8.bf16 %v232
    %v449 = vunpack.c.h.s8.bf16 %v229
    %v450 = vunpack.c.h.s8.bf16 %v230
    %v451 = vunpack.c.h.s8.bf16 %v231
    %v452 = vunpack.c.h.s8.bf16 %v232
    %v453 = vunpack.c.l.s8.bf16 %v233
    %v454 = vunpack.c.l.s8.bf16 %v234
    %v455 = vunpack.c.l.s8.bf16 %v235
    %v456 = vunpack.c.l.s8.bf16 %v236
    %v457 = vunpack.c.h.s8.bf16 %v233
    %v458 = vunpack.c.h.s8.bf16 %v234
    %v459 = vunpack.c.h.s8.bf16 %v235
    %v460 = vunpack.c.h.s8.bf16 %v236
    %v461 = vunpack.c.l.s8.bf16 %v237
    %v462 = vunpack.c.l.s8.bf16 %v238
    %v463 = vunpack.c.l.s8.bf16 %v239
    %v464 = vunpack.c.l.s8.bf16 %v240
    %v465 = vunpack.c.h.s8.bf16 %v237
    %v466 = vunpack.c.h.s8.bf16 %v238
    %v467 = vunpack.c.h.s8.bf16 %v239
    %v468 = vunpack.c.h.s8.bf16 %v240
    %v469 = vunpack.c.l.s8.bf16 %v241
    %v470 = vunpack.c.l.s8.bf16 %v242
    %v471 = vunpack.c.l.s8.bf16 %v243
    %v472 = vunpack.c.l.s8.bf16 %v244
    %v473 = vunpack.c.h.s8.bf16 %v241
    %v474 = vunpack.c.h.s8.bf16 %v242
    %v475 = vunpack.c.h.s8.bf16 %v243
    %v476 = vunpack.c.h.s8.bf16 %v244
    %v477 = vunpack.c.l.s8.bf16 %v245
    %v478 = vunpack.c.l.s8.bf16 %v246
    %v479 = vunpack.c.l.s8.bf16 %v247
    %v480 = vunpack.c.l.s8.bf16 %v248
    %v481 = vunpack.c.h.s8.bf16 %v245
    %v482 = vunpack.c.h.s8.bf16 %v246
    %v483 = vunpack.c.h.s8.bf16 %v247
    %v484 = vunpack.c.h.s8.bf16 %v248
    %v485 = vunpack.c.l.s8.bf16 %v249
    %v486 = vunpack.c.l.s8.bf16 %v250
    %v487 = vunpack.c.l.s8.bf16 %v251
    %v488 = vunpack.c.l.s8.bf16 %v252
    %v489 = vunpack.c.h.s8.bf16 %v249
    %v490 = vunpack.c.h.s8.bf16 %v250
    %v491 = vunpack.c.h.s8.bf16 %v251
    %v492 = vunpack.c.h.s8.bf16 %v252
    %v493 = vunpack.c.l.s8.bf16 %v253
    %v494 = vunpack.c.l.s8.bf16 %v254
    %v495 = vunpack.c.l.s8.bf16 %v255
    %v496 = vunpack.c.l.s8.bf16 %v256
    %v497 = vunpack.c.h.s8.bf16 %v253
    %v498 = vunpack.c.h.s8.bf16 %v254
    %v499 = vunpack.c.h.s8.bf16 %v255
    %v500 = vunpack.c.h.s8.bf16 %v256
    %v501 = vunpack.c.l.s8.bf16 %v257
    %v502 = vunpack.c.l.s8.bf16 %v258
    %v503 = vunpack.c.l.s8.bf16 %v259
    %v504 = vunpack.c.l.s8.bf16 %v260
    %v505 = vunpack.c.h.s8.bf16 %v257
    %v506 = vunpack.c.h.s8.bf16 %v258
    %v507 = vunpack.c.h.s8.bf16 %v259
    %v508 = vunpack.c.h.s8.bf16 %v260
    %v509 = vunpack.c.l.s8.bf16 %v261
    %v510 = vunpack.c.l.s8.bf16 %v262
    %v511 = vunpack.c.l.s8.bf16 %v263
    %v512 = vunpack.c.l.s8.bf16 %v264
    %v513 = vunpack.c.h.s8.bf16 %v261
    %v514 = vunpack.c.h.s8.bf16 %v262
    %v515 = vunpack.c.h.s8.bf16 %v263
    %v516 = vunpack.c.h.s8.bf16 %v264
    %v517 = vunpack.c.l.s8.bf16 %v265
    %v518 = vunpack.c.l.s8.bf16 %v266
    %v519 = vunpack.c.l.s8.bf16 %v267
    %v520 = vunpack.c.l.s8.bf16 %v268
    %v521 = vunpack.c.h.s8.bf16 %v265
    %v522 = vunpack.c.h.s8.bf16 %v266
    %v523 = vunpack.c.h.s8.bf16 %v267
    %v524 = vunpack.c.h.s8.bf16 %v268
    %525 = vmatprep.subr.bf16.mxu0 %v270
    %526 = vmatpush1.bf16.msra.mxu0 %v269
    %527 = vmatprep.subr.bf16.mxu0 %v274
    %528 = vmatpush1.bf16.msra.mxu0 %v273
    %529 = vmatprep.subr.bf16.mxu0 %v278
    %530 = vmatpush1.bf16.msra.mxu0 %v277
    %531 = vmatprep.subr.bf16.mxu0 %v282
    %532 = vmatpush1.bf16.msra.mxu0 %v281
    %533 = vmatprep.subr.bf16.mxu0 %v286
    %534 = vmatpush1.bf16.msra.mxu0 %v285
    %535 = vmatprep.subr.bf16.mxu0 %v290
    %536 = vmatpush1.bf16.msra.mxu0 %v289
    %537 = vmatprep.subr.bf16.mxu0 %v294
    %538 = vmatpush1.bf16.msra.mxu0 %v293
    %539 = vmatprep.subr.bf16.mxu0 %v298
    %540 = vmatpush1.bf16.msra.mxu0 %v297
    %541 = vmatprep.subr.bf16.mxu0 %v302
    %542 = vmatpush1.bf16.msra.mxu0 %v301
    %543 = vmatprep.subr.bf16.mxu0 %v306
    %544 = vmatpush1.bf16.msra.mxu0 %v305
    %545 = vmatprep.subr.bf16.mxu0 %v310
    %546 = vmatpush1.bf16.msra.mxu0 %v309
    %547 = vmatprep.subr.bf16.mxu0 %v314
    %548 = vmatpush1.bf16.msra.mxu0 %v313
    %549 = vmatprep.subr.bf16.mxu0 %v318
    %550 = vmatpush1.bf16.msra.mxu0 %v317
    %551 = vmatprep.subr.bf16.mxu0 %v322
    %552 = vmatpush1.bf16.msra.mxu0 %v321
    %553 = vmatprep.subr.bf16.mxu0 %v326
    %554 = vmatpush1.bf16.msra.mxu0 %v325
    %555 = vmatprep.subr.bf16.mxu0 %v330
    %556 = vmatpush1.bf16.msra.mxu0 %v329
    %557 = vmatprep.mubr.bf16.mxu0 %v134
    %558 = vmatmul.mubr.bf16.gmra.mrb[0].mxu0 %v133
    %v559 = vpop.f32.mrb[0].mxu0
    %v560 = vadd.f32 0.0, %v559
    %v561 = vpop.f32.mrb[0].mxu0
    %v562 = vadd.f32 0.0, %v561
    %v563 = vpop.f32.mrb[0].mxu0
    %v564 = vadd.f32 0.0, %v563
    %v565 = vpop.f32.mrb[0].mxu0
    %v566 = vadd.f32 0.0, %v565
    %567 = vdwg.mxu0
    %568 = vmatprep.subr.bf16.mxu0 %v334
    %569 = vmatpush1.bf16.msra.mxu0 %v333
    %570 = vmatprep.subr.bf16.mxu0 %v338
    %571 = vmatpush1.bf16.msra.mxu0 %v337
    %572 = vmatprep.subr.bf16.mxu0 %v342
    %573 = vmatpush1.bf16.msra.mxu0 %v341
    %574 = vmatprep.subr.bf16.mxu0 %v346
    %575 = vmatpush1.bf16.msra.mxu0 %v345
    %576 = vmatprep.subr.bf16.mxu0 %v350
    %577 = vmatpush1.bf16.msra.mxu0 %v349
    %578 = vmatprep.subr.bf16.mxu0 %v354
    %579 = vmatpush1.bf16.msra.mxu0 %v353
    %580 = vmatprep.subr.bf16.mxu0 %v358
    %581 = vmatpush1.bf16.msra.mxu0 %v357
    %582 = vmatprep.subr.bf16.mxu0 %v362
    %583 = vmatpush1.bf16.msra.mxu0 %v361
    %584 = vmatprep.subr.bf16.mxu0 %v366
    %585 = vmatpush1.bf16.msra.mxu0 %v365
    %586 = vmatprep.subr.bf16.mxu0 %v370
    %587 = vmatpush1.bf16.msra.mxu0 %v369
    %588 = vmatprep.subr.bf16.mxu0 %v374
    %589 = vmatpush1.bf16.msra.mxu0 %v373
    %590 = vmatprep.subr.bf16.mxu0 %v378
    %591 = vmatpush1.bf16.msra.mxu0 %v377
    %592 = vmatprep.subr.bf16.mxu0 %v382
    %593 = vmatpush1.bf16.msra.mxu0 %v381
    %594 = vmatprep.subr.bf16.mxu0 %v386
    %595 = vmatpush1.bf16.msra.mxu0 %v385
    %596 = vmatprep.subr.bf16.mxu0 %v390
    %597 = vmatpush1.bf16.msra.mxu0 %v389
    %598 = vmatprep.subr.bf16.mxu0 %v394
    %599 = vmatpush1.bf16.msra.mxu0 %v393
    %600 = vmatprep.mubr.bf16.mxu0 %v136
    %601 = vmatmul.mubr.bf16.gmra.mrb[0].mxu0 %v135
    %v602 = vpop.f32.mrb[0].mxu0
    %v603 = vadd.f32 %v560, %v602
    %v604 = vpop.f32.mrb[0].mxu0
    %v605 = vadd.f32 %v562, %v604
    %v606 = vpop.f32.mrb[0].mxu0
    %v607 = vadd.f32 %v564, %v606
    %v608 = vpop.f32.mrb[0].mxu0
    %v609 = vadd.f32 %v566, %v608
    %610 = vdwg.mxu0
    %611 = vmatprep.subr.bf16.mxu0 %v398
    %612 = vmatpush1.bf16.msra.mxu0 %v397
    %613 = vmatprep.subr.bf16.mxu0 %v402
    %614 = vmatpush1.bf16.msra.mxu0 %v401
    %615 = vmatprep.subr.bf16.mxu0 %v406
    %616 = vmatpush1.bf16.msra.mxu0 %v405
    %617 = vmatprep.subr.bf16.mxu0 %v410
    %618 = vmatpush1.bf16.msra.mxu0 %v409
    %619 = vmatprep.subr.bf16.mxu0 %v414
    %620 = vmatpush1.bf16.msra.mxu0 %v413
    %621 = vmatprep.subr.bf16.mxu0 %v418
    %622 = vmatpush1.bf16.msra.mxu0 %v417
    %623 = vmatprep.subr.bf16.mxu0 %v422
    %624 = vmatpush1.bf16.msra.mxu0 %v421
    %625 = vmatprep.subr.bf16.mxu0 %v426
    %626 = vmatpush1.bf16.msra.mxu0 %v425
    %627 = vmatprep.subr.bf16.mxu0 %v430
    %628 = vmatpush1.bf16.msra.mxu0 %v429
    %629 = vmatprep.subr.bf16.mxu0 %v434
    %630 = vmatpush1.bf16.msra.mxu0 %v433
    %631 = vmatprep.subr.bf16.mxu0 %v438
    %632 = vmatpush1.bf16.msra.mxu0 %v437
    %633 = vmatprep.subr.bf16.mxu0 %v442
    %634 = vmatpush1.bf16.msra.mxu0 %v441
    %635 = vmatprep.subr.bf16.mxu0 %v446
    %636 = vmatpush1.bf16.msra.mxu0 %v445
    %637 = vmatprep.subr.bf16.mxu0 %v450
    %638 = vmatpush1.bf16.msra.mxu0 %v449
    %639 = vmatprep.subr.bf16.mxu0 %v454
    %640 = vmatpush1.bf16.msra.mxu0 %v453
    %641 = vmatprep.subr.bf16.mxu0 %v458
    %642 = vmatpush1.bf16.msra.mxu0 %v457
    %643 = vmatprep.mubr.bf16.mxu0 %v138
    %644 = vmatmul.mubr.bf16.gmra.mrb[0].mxu0 %v137
    %v645 = vpop.f32.mrb[0].mxu0
    %v646 = vadd.f32 %v603, %v645
    %v647 = vpop.f32.mrb[0].mxu0
    %v648 = vadd.f32 %v605, %v647
    %v649 = vpop.f32.mrb[0].mxu0
    %v650 = vadd.f32 %v607, %v649
    %v651 = vpop.f32.mrb[0].mxu0
    %v652 = vadd.f32 %v609, %v651
    %653 = vdwg.mxu0
    %654 = vmatprep.subr.bf16.mxu0 %v462
    %655 = vmatpush1.bf16.msra.mxu0 %v461
    %656 = vmatprep.subr.bf16.mxu0 %v466
    %657 = vmatpush1.bf16.msra.mxu0 %v465
    %658 = vmatprep.subr.bf16.mxu0 %v470
    %659 = vmatpush1.bf16.msra.mxu0 %v469
    %660 = vmatprep.subr.bf16.mxu0 %v474
    %661 = vmatpush1.bf16.msra.mxu0 %v473
    %662 = vmatprep.subr.bf16.mxu0 %v478
    %663 = vmatpush1.bf16.msra.mxu0 %v477
    %664 = vmatprep.subr.bf16.mxu0 %v482
    %665 = vmatpush1.bf16.msra.mxu0 %v481
    %666 = vmatprep.subr.bf16.mxu0 %v486
    %667 = vmatpush1.bf16.msra.mxu0 %v485
    %668 = vmatprep.subr.bf16.mxu0 %v490
    %669 = vmatpush1.bf16.msra.mxu0 %v489
    %670 = vmatprep.subr.bf16.mxu0 %v494
    %671 = vmatpush1.bf16.msra.mxu0 %v493
    %672 = vmatprep.subr.bf16.mxu0 %v498
    %673 = vmatpush1.bf16.msra.mxu0 %v497
    %674 = vmatprep.subr.bf16.mxu0 %v502
    %675 = vmatpush1.bf16.msra.mxu0 %v501
    %676 = vmatprep.subr.bf16.mxu0 %v506
    %677 = vmatpush1.bf16.msra.mxu0 %v505
    %678 = vmatprep.subr.bf16.mxu0 %v510
    %679 = vmatpush1.bf16.msra.mxu0 %v509
    %680 = vmatprep.subr.bf16.mxu0 %v514
    %681 = vmatpush1.bf16.msra.mxu0 %v513
    %682 = vmatprep.subr.bf16.mxu0 %v518
    %683 = vmatpush1.bf16.msra.mxu0 %v517
    %684 = vmatprep.subr.bf16.mxu0 %v522
    %685 = vmatpush1.bf16.msra.mxu0 %v521
    %686 = vmatprep.mubr.bf16.mxu0 %v140
    %687 = vmatmul.mubr.bf16.gmra.mrb[0].mxu0 %v139
    %v688 = vpop.f32.mrb[0].mxu0
    %v689 = vadd.f32 %v646, %v688
    %v690 = vpop.f32.mrb[0].mxu0
    %v691 = vadd.f32 %v648, %v690
    %v692 = vpop.f32.mrb[0].mxu0
    %v693 = vadd.f32 %v650, %v692
    %v694 = vpop.f32.mrb[0].mxu0
    %v695 = vadd.f32 %v652, %v694
    %696 = vdwg.mxu0
    %697 = vmatprep.subr.bf16.mxu0 %v272
    %698 = vmatpush1.bf16.msra.mxu0 %v271
    %699 = vmatprep.subr.bf16.mxu0 %v276
    %700 = vmatpush1.bf16.msra.mxu0 %v275
    %701 = vmatprep.subr.bf16.mxu0 %v280
    %702 = vmatpush1.bf16.msra.mxu0 %v279
    %703 = vmatprep.subr.bf16.mxu0 %v284
    %704 = vmatpush1.bf16.msra.mxu0 %v283
    %705 = vmatprep.subr.bf16.mxu0 %v288
    %706 = vmatpush1.bf16.msra.mxu0 %v287
    %707 = vmatprep.subr.bf16.mxu0 %v292
    %708 = vmatpush1.bf16.msra.mxu0 %v291
    %709 = vmatprep.subr.bf16.mxu0 %v296
    %710 = vmatpush1.bf16.msra.mxu0 %v295
    %711 = vmatprep.subr.bf16.mxu0 %v300
    %712 = vmatpush1.bf16.msra.mxu0 %v299
    %713 = vmatprep.subr.bf16.mxu0 %v304
    %714 = vmatpush1.bf16.msra.mxu0 %v303
    %715 = vmatprep.subr.bf16.mxu0 %v308
    %716 = vmatpush1.bf16.msra.mxu0 %v307
    %717 = vmatprep.subr.bf16.mxu0 %v312
    %718 = vmatpush1.bf16.msra.mxu0 %v311
    %719 = vmatprep.subr.bf16.mxu0 %v316
    %720 = vmatpush1.bf16.msra.mxu0 %v315
    %721 = vmatprep.subr.bf16.mxu0 %v320
    %722 = vmatpush1.bf16.msra.mxu0 %v319
    %723 = vmatprep.subr.bf16.mxu0 %v324
    %724 = vmatpush1.bf16.msra.mxu0 %v323
    %725 = vmatprep.subr.bf16.mxu0 %v328
    %726 = vmatpush1.bf16.msra.mxu0 %v327
    %727 = vmatprep.subr.bf16.mxu0 %v332
    %728 = vmatpush1.bf16.msra.mxu0 %v331
    %729 = vmatprep.mubr.bf16.mxu0 %v134
    %730 = vmatmul.mubr.bf16.gmra.mrb[0].mxu0 %v133
    %v731 = vpop.f32.mrb[0].mxu0
    %v732 = vadd.f32 0.0, %v731
    %v733 = vpop.f32.mrb[0].mxu0
    %v734 = vadd.f32 0.0, %v733
    %v735 = vpop.f32.mrb[0].mxu0
    %v736 = vadd.f32 0.0, %v735
    %v737 = vpop.f32.mrb[0].mxu0
    %v738 = vadd.f32 0.0, %v737
    %739 = vdwg.mxu0
    %740 = vmatprep.subr.bf16.mxu0 %v336
    %741 = vmatpush1.bf16.msra.mxu0 %v335
    %742 = vmatprep.subr.bf16.mxu0 %v340
    %743 = vmatpush1.bf16.msra.mxu0 %v339
    %744 = vmatprep.subr.bf16.mxu0 %v344
    %745 = vmatpush1.bf16.msra.mxu0 %v343
    %746 = vmatprep.subr.bf16.mxu0 %v348
    %747 = vmatpush1.bf16.msra.mxu0 %v347
    %748 = vmatprep.subr.bf16.mxu0 %v352
    %749 = vmatpush1.bf16.msra.mxu0 %v351
    %750 = vmatprep.subr.bf16.mxu0 %v356
    %751 = vmatpush1.bf16.msra.mxu0 %v355
    %752 = vmatprep.subr.bf16.mxu0 %v360
    %753 = vmatpush1.bf16.msra.mxu0 %v359
    %754 = vmatprep.subr.bf16.mxu0 %v364
    %755 = vmatpush1.bf16.msra.mxu0 %v363
    %756 = vmatprep.subr.bf16.mxu0 %v368
    %757 = vmatpush1.bf16.msra.mxu0 %v367
    %758 = vmatprep.subr.bf16.mxu0 %v372
    %759 = vmatpush1.bf16.msra.mxu0 %v371
    %760 = vmatprep.subr.bf16.mxu0 %v376
    %761 = vmatpush1.bf16.msra.mxu0 %v375
    %762 = vmatprep.subr.bf16.mxu0 %v380
    %763 = vmatpush1.bf16.msra.mxu0 %v379
    %764 = vmatprep.subr.bf16.mxu0 %v384
    %765 = vmatpush1.bf16.msra.mxu0 %v383
    %766 = vmatprep.subr.bf16.mxu0 %v388
    %767 = vmatpush1.bf16.msra.mxu0 %v387
    %768 = vmatprep.subr.bf16.mxu0 %v392
    %769 = vmatpush1.bf16.msra.mxu0 %v391
    %770 = vmatprep.subr.bf16.mxu0 %v396
    %771 = vmatpush1.bf16.msra.mxu0 %v395
    %772 = vmatprep.mubr.bf16.mxu0 %v136
    %773 = vmatmul.mubr.bf16.gmra.mrb[0].mxu0 %v135
    %v774 = vpop.f32.mrb[0].mxu0
    %v775 = vadd.f32 %v732, %v774
    %v776 = vpop.f32.mrb[0].mxu0
    %v777 = vadd.f32 %v734, %v776
    %v778 = vpop.f32.mrb[0].mxu0
    %v779 = vadd.f32 %v736, %v778
    %v780 = vpop.f32.mrb[0].mxu0
    %v781 = vadd.f32 %v738, %v780
    %782 = vdwg.mxu0
    %783 = vmatprep.subr.bf16.mxu0 %v400
    %784 = vmatpush1.bf16.msra.mxu0 %v399
    %785 = vmatprep.subr.bf16.mxu0 %v404
    %786 = vmatpush1.bf16.msra.mxu0 %v403
    %787 = vmatprep.subr.bf16.mxu0 %v408
    %788 = vmatpush1.bf16.msra.mxu0 %v407
    %789 = vmatprep.subr.bf16.mxu0 %v412
    %790 = vmatpush1.bf16.msra.mxu0 %v411
    %791 = vmatprep.subr.bf16.mxu0 %v416
    %792 = vmatpush1.bf16.msra.mxu0 %v415
    %793 = vmatprep.subr.bf16.mxu0 %v420
    %794 = vmatpush1.bf16.msra.mxu0 %v419
    %795 = vmatprep.subr.bf16.mxu0 %v424
    %796 = vmatpush1.bf16.msra.mxu0 %v423
    %797 = vmatprep.subr.bf16.mxu0 %v428
    %798 = vmatpush1.bf16.msra.mxu0 %v427
    %799 = vmatprep.subr.bf16.mxu0 %v432
    %800 = vmatpush1.bf16.msra.mxu0 %v431
    %801 = vmatprep.subr.bf16.mxu0 %v436
    %802 = vmatpush1.bf16.msra.mxu0 %v435
    %803 = vmatprep.subr.bf16.mxu0 %v440
    %804 = vmatpush1.bf16.msra.mxu0 %v439
    %805 = vmatprep.subr.bf16.mxu0 %v444
    %806 = vmatpush1.bf16.msra.mxu0 %v443
    %807 = vmatprep.subr.bf16.mxu0 %v448
    %808 = vmatpush1.bf16.msra.mxu0 %v447
    %809 = vmatprep.subr.bf16.mxu0 %v452
    %810 = vmatpush1.bf16.msra.mxu0 %v451
    %811 = vmatprep.subr.bf16.mxu0 %v456
    %812 = vmatpush1.bf16.msra.mxu0 %v455
    %813 = vmatprep.subr.bf16.mxu0 %v460
    %814 = vmatpush1.bf16.msra.mxu0 %v459
    %815 = vmatprep.mubr.bf16.mxu0 %v138
    %816 = vmatmul.mubr.bf16.gmra.mrb[0].mxu0 %v137
    %v817 = vpop.f32.mrb[0].mxu0
    %v818 = vadd.f32 %v775, %v817
    %v819 = vpop.f32.mrb[0].mxu0
    %v820 = vadd.f32 %v777, %v819
    %v821 = vpop.f32.mrb[0].mxu0
    %v822 = vadd.f32 %v779, %v821
    %v823 = vpop.f32.mrb[0].mxu0
    %v824 = vadd.f32 %v781, %v823
    %825 = vdwg.mxu0
    %826 = vmatprep.subr.bf16.mxu0 %v464
    %827 = vmatpush1.bf16.msra.mxu0 %v463
    %828 = vmatprep.subr.bf16.mxu0 %v468
    %829 = vmatpush1.bf16.msra.mxu0 %v467
    %830 = vmatprep.subr.bf16.mxu0 %v472
    %831 = vmatpush1.bf16.msra.mxu0 %v471
    %832 = vmatprep.subr.bf16.mxu0 %v476
    %833 = vmatpush1.bf16.msra.mxu0 %v475
    %834 = vmatprep.subr.bf16.mxu0 %v480
    %835 = vmatpush1.bf16.msra.mxu0 %v479
    %836 = vmatprep.subr.bf16.mxu0 %v484
    %837 = vmatpush1.bf16.msra.mxu0 %v483
    %838 = vmatprep.subr.bf16.mxu0 %v488
    %839 = vmatpush1.bf16.msra.mxu0 %v487
    %840 = vmatprep.subr.bf16.mxu0 %v492
    %841 = vmatpush1.bf16.msra.mxu0 %v491
    %842 = vmatprep.subr.bf16.mxu0 %v496
    %843 = vmatpush1.bf16.msra.mxu0 %v495
    %844 = vmatprep.subr.bf16.mxu0 %v500
    %845 = vmatpush1.bf16.msra.mxu0 %v499
    %846 = vmatprep.subr.bf16.mxu0 %v504
    %847 = vmatpush1.bf16.msra.mxu0 %v503
    %848 = vmatprep.subr.bf16.mxu0 %v508
    %849 = vmatpush1.bf16.msra.mxu0 %v507
    %850 = vmatprep.subr.bf16.mxu0 %v512
    %851 = vmatpush1.bf16.msra.mxu0 %v511
    %852 = vmatprep.subr.bf16.mxu0 %v516
    %853 = vmatpush1.bf16.msra.mxu0 %v515
    %854 = vmatprep.subr.bf16.mxu0 %v520
    %855 = vmatpush1.bf16.msra.mxu0 %v519
    %856 = vmatprep.subr.bf16.mxu0 %v524
    %857 = vmatpush1.bf16.msra.mxu0 %v523
    %858 = vmatprep.mubr.bf16.mxu0 %v140
    %859 = vmatmul.mubr.bf16.gmra.mrb[0].mxu0 %v139
    %v860 = vpop.f32.mrb[0].mxu0
    %v861 = vadd.f32 %v818, %v860
    %v862 = vpop.f32.mrb[0].mxu0
    %v863 = vadd.f32 %v820, %v862
    %v864 = vpop.f32.mrb[0].mxu0
    %v865 = vadd.f32 %v822, %v864
    %v866 = vpop.f32.mrb[0].mxu0
    %v867 = vadd.f32 %v824, %v866
    %868 = vdwg.mxu0
    %v869 = vld [vmem:[%s3] sm:$0xff]
    %v870 = vld [vmem:[%s3 + $0x8] sm:$0xff]
    %v871 = vld [vmem:[%s3 + $0x10] sm:$0xff]
    %v872 = vld [vmem:[%s3 + $0x18] sm:$0xff]
    %v873 = vld [vmem:[%s3 + $0x20] sm:$0x3]
    %v874 = vld [vmem:[%s3 + $0x28] sm:$0x3]
    %v875 = vld [vmem:[%s3 + $0x30] sm:$0x3]
    %v876 = vld [vmem:[%s3 + $0x38] sm:$0x3]
    %v877 = vmul.f32 %v689, %v869
    %v878 = vmul.f32 %v691, %v870
    %v879 = vmul.f32 %v861, %v871
    %v880 = vmul.f32 %v863, %v872
    %v881 = vmul.f32 %v693, %v873
    %v882 = vmul.f32 %v695, %v874
    %v883 = vmul.f32 %v865, %v875
    %v884 = vmul.f32 %v867, %v876
    %v885 = vld [vmem:[#allocation5] sm:$0xff]
    %v886 = vld [vmem:[#allocation5 + $0x8] sm:$0xff]
    %v887 = vld [vmem:[#allocation5 + $0x10] sm:$0xff]
    %v888 = vld [vmem:[#allocation5 + $0x18] sm:$0xff]
    %v889 = vld [vmem:[#allocation5 + $0x20] sm:$0x3]
    %v890 = vld [vmem:[#allocation5 + $0x28] sm:$0x3]
    %v891 = vld [vmem:[#allocation5 + $0x30] sm:$0x3]
    %v892 = vld [vmem:[#allocation5 + $0x38] sm:$0x3]
    %v893 = vadd.f32 %v877, %v885
    %v894 = vadd.f32 %v878, %v886
    %v895 = vadd.f32 %v879, %v887
    %v896 = vadd.f32 %v880, %v888
    %v897 = vadd.f32 %v881, %v889
    %v898 = vadd.f32 %v882, %v890
    %v899 = vadd.f32 %v883, %v891
    %v900 = vadd.f32 %v884, %v892
    %v901 = vmax.f32 %v893, 0.0
    %v902 = vmax.f32 %v894, 0.0
    %v903 = vmax.f32 %v895, 0.0
    %v904 = vmax.f32 %v896, 0.0
    %v905 = vmax.f32 %v897, 0.0
    %v906 = vmax.f32 %v898, 0.0
    %v907 = vmax.f32 %v899, 0.0
    %v908 = vmax.f32 %v900, 0.0
    %v909 = vpack.c.bf16 %v905, %v901
    %v910 = vpack.c.bf16 %v906, %v902
    %v911 = vpack.c.bf16 %v907, %v903
    %v912 = vpack.c.bf16 %v908, %v904
    %v913 = vld [vmem:[#allocation7] sm:$0xff]
    %v914 = vld [vmem:[#allocation7 + $0x8] sm:$0xff]
    %v915 = vld [vmem:[#allocation7 + $0x10] sm:$0xff]
    %v916 = vld [vmem:[#allocation7 + $0x18] sm:$0xff]
    %v917 = vld [vmem:[#allocation7 + $0x20] sm:$0xff]
    %v918 = vld [vmem:[#allocation7 + $0x28] sm:$0xff]
    %v919 = vld [vmem:[#allocation7 + $0x30] sm:$0xff]
    %v920 = vld [vmem:[#allocation7 + $0x38] sm:$0xff]
    %v921 = vld [vmem:[#allocation7 + $0x40] sm:$0xff]
    %v922 = vld [vmem:[#allocation7 + $0x48] sm:$0xff]
    %v923 = vld [vmem:[#allocation7 + $0x50] sm:$0xff]
    %v924 = vld [vmem:[#allocation7 + $0x58] sm:$0xff]
    %v925 = vld [vmem:[#allocation7 + $0x60] sm:$0xff]
    %v926 = vld [vmem:[#allocation7 + $0x68] sm:$0xff]
    %v927 = vld [vmem:[#allocation7 + $0x70] sm:$0xff]
    %v928 = vld [vmem:[#allocation7 + $0x78] sm:$0xff]
    %v929 = vld [vmem:[#allocation7 + $0x80] sm:$0xff]
    %v930 = vld [vmem:[#allocation7 + $0x88] sm:$0xff]
    %v931 = vld [vmem:[#allocation7 + $0x90] sm:$0xff]
    %v932 = vld [vmem:[#allocation7 + $0x98] sm:$0xff]
    %v933 = vld [vmem:[#allocation7 + $0xa0] sm:$0xff]
    %v934 = vld [vmem:[#allocation7 + $0xa8] sm:$0xff]
    %v935 = vld [vmem:[#allocation7 + $0xb0] sm:$0xff]
    %v936 = vld [vmem:[#allocation7 + $0xb8] sm:$0xff]
    %v937 = vld [vmem:[#allocation7 + $0xc0] sm:$0xff]
    %v938 = vld [vmem:[#allocation7 + $0xc8] sm:$0xff]
    %v939 = vld [vmem:[#allocation7 + $0xd0] sm:$0xff]
    %v940 = vld [vmem:[#allocation7 + $0xd8] sm:$0xff]
    %v941 = vld [vmem:[#allocation7 + $0xe0] sm:$0xff]
    %v942 = vld [vmem:[#allocation7 + $0xe8] sm:$0xff]
    %v943 = vld [vmem:[#allocation7 + $0xf0] sm:$0xff]
    %v944 = vld [vmem:[#allocation7 + $0xf8] sm:$0xff]
    %v945 = vld [vmem:[#allocation7 + $0x100] sm:$0xff]
    %v946 = vld [vmem:[#allocation7 + $0x108] sm:$0xff]
    %v947 = vld [vmem:[#allocation7 + $0x110] sm:$0xff]
    %v948 = vld [vmem:[#allocation7 + $0x118] sm:$0xff]
    %v949 = vld [vmem:[#allocation7 + $0x120] sm:$0xff]
    %v950 = vld [vmem:[#allocation7 + $0x128] sm:$0xff]
    %v951 = vld [vmem:[#allocation7 + $0x130] sm:$0xff]
    %v952 = vld [vmem:[#allocation7 + $0x138] sm:$0xff]
    %v953 = vld [vmem:[#allocation7 + $0x140] sm:$0xff]
    %v954 = vld [vmem:[#allocation7 + $0x148] sm:$0xff]
    %v955 = vld [vmem:[#allocation7 + $0x150] sm:$0xff]
    %v956 = vld [vmem:[#allocation7 + $0x158] sm:$0xff]
    %v957 = vld [vmem:[#allocation7 + $0x160] sm:$0xff]
    %v958 = vld [vmem:[#allocation7 + $0x168] sm:$0xff]
    %v959 = vld [vmem:[#allocation7 + $0x170] sm:$0xff]
    %v960 = vld [vmem:[#allocation7 + $0x178] sm:$0xff]
    %v961 = vld [vmem:[#allocation7 + $0x180] sm:$0xff]
    %v962 = vld [vmem:[#allocation7 + $0x188] sm:$0xff]
    %v963 = vld [vmem:[#allocation7 + $0x190] sm:$0xff]
    %v964 = vld [vmem:[#allocation7 + $0x198] sm:$0xff]
    %v965 = vld [vmem:[#allocation7 + $0x1a0] sm:$0xff]
    %v966 = vld [vmem:[#allocation7 + $0x1a8] sm:$0xff]
    %v967 = vld [vmem:[#allocation7 + $0x1b0] sm:$0xff]
    %v968 = vld [vmem:[#allocation7 + $0x1b8] sm:$0xff]
    %v969 = vld [vmem:[#allocation7 + $0x1c0] sm:$0xff]
    %v970 = vld [vmem:[#allocation7 + $0x1c8] sm:$0xff]
    %v971 = vld [vmem:[#allocation7 + $0x1d0] sm:$0xff]
    %v972 = vld [vmem:[#allocation7 + $0x1d8] sm:$0xff]
    %v973 = vld [vmem:[#allocation7 + $0x1e0] sm:$0xff]
    %v974 = vld [vmem:[#allocation7 + $0x1e8] sm:$0xff]
    %v975 = vld [vmem:[#allocation7 + $0x1f0] sm:$0xff]
    %v976 = vld [vmem:[#allocation7 + $0x1f8] sm:$0xff]
    %v977 = vunpack.c.l.s8.bf16 %v913
    %v978 = vunpack.c.l.s8.bf16 %v914
    %v979 = vunpack.c.l.s8.bf16 %v915
    %v980 = vunpack.c.l.s8.bf16 %v916
    %v981 = vunpack.c.h.s8.bf16 %v913
    %v982 = vunpack.c.h.s8.bf16 %v914
    %v983 = vunpack.c.h.s8.bf16 %v915
    %v984 = vunpack.c.h.s8.bf16 %v916
    %v985 = vunpack.c.l.s8.bf16 %v917
    %v986 = vunpack.c.l.s8.bf16 %v918
    %v987 = vunpack.c.l.s8.bf16 %v919
    %v988 = vunpack.c.l.s8.bf16 %v920
    %v989 = vunpack.c.h.s8.bf16 %v917
    %v990 = vunpack.c.h.s8.bf16 %v918
    %v991 = vunpack.c.h.s8.bf16 %v919
    %v992 = vunpack.c.h.s8.bf16 %v920
    %v993 = vunpack.c.l.s8.bf16 %v921
    %v994 = vunpack.c.l.s8.bf16 %v922
    %v995 = vunpack.c.l.s8.bf16 %v923
    %v996 = vunpack.c.l.s8.bf16 %v924
    %v997 = vunpack.c.h.s8.bf16 %v921
    %v998 = vunpack.c.h.s8.bf16 %v922
    %v999 = vunpack.c.h.s8.bf16 %v923
    %v1000 = vunpack.c.h.s8.bf16 %v924
    %v1001 = vunpack.c.l.s8.bf16 %v925
    %v1002 = vunpack.c.l.s8.bf16 %v926
    %v1003 = vunpack.c.l.s8.bf16 %v927
    %v1004 = vunpack.c.l.s8.bf16 %v928
    %v1005 = vunpack.c.h.s8.bf16 %v925
    %v1006 = vunpack.c.h.s8.bf16 %v926
    %v1007 = vunpack.c.h.s8.bf16 %v927
    %v1008 = vunpack.c.h.s8.bf16 %v928
    %v1009 = vunpack.c.l.s8.bf16 %v929
    %v1010 = vunpack.c.l.s8.bf16 %v930
    %v1011 = vunpack.c.l.s8.bf16 %v931
    %v1012 = vunpack.c.l.s8.bf16 %v932
    %v1013 = vunpack.c.h.s8.bf16 %v929
    %v1014 = vunpack.c.h.s8.bf16 %v930
    %v1015 = vunpack.c.h.s8.bf16 %v931
    %v1016 = vunpack.c.h.s8.bf16 %v932
    %v1017 = vunpack.c.l.s8.bf16 %v933
    %v1018 = vunpack.c.l.s8.bf16 %v934
    %v1019 = vunpack.c.l.s8.bf16 %v935
    %v1020 = vunpack.c.l.s8.bf16 %v936
    %v1021 = vunpack.c.h.s8.bf16 %v933
    %v1022 = vunpack.c.h.s8.bf16 %v934
    %v1023 = vunpack.c.h.s8.bf16 %v935
    %v1024 = vunpack.c.h.s8.bf16 %v936
    %v1025 = vunpack.c.l.s8.bf16 %v937
    %v1026 = vunpack.c.l.s8.bf16 %v938
    %v1027 = vunpack.c.l.s8.bf16 %v939
    %v1028 = vunpack.c.l.s8.bf16 %v940
    %v1029 = vunpack.c.h.s8.bf16 %v937
    %v1030 = vunpack.c.h.s8.bf16 %v938
    %v1031 = vunpack.c.h.s8.bf16 %v939
    %v1032 = vunpack.c.h.s8.bf16 %v940
    %v1033 = vunpack.c.l.s8.bf16 %v941
    %v1034 = vunpack.c.l.s8.bf16 %v942
    %v1035 = vunpack.c.l.s8.bf16 %v943
    %v1036 = vunpack.c.l.s8.bf16 %v944
    %v1037 = vunpack.c.h.s8.bf16 %v941
    %v1038 = vunpack.c.h.s8.bf16 %v942
    %v1039 = vunpack.c.h.s8.bf16 %v943
    %v1040 = vunpack.c.h.s8.bf16 %v944
    %v1041 = vunpack.c.l.s8.bf16 %v945
    %v1042 = vunpack.c.l.s8.bf16 %v946
    %v1043 = vunpack.c.l.s8.bf16 %v947
    %v1044 = vunpack.c.l.s8.bf16 %v948
    %v1045 = vunpack.c.h.s8.bf16 %v945
    %v1046 = vunpack.c.h.s8.bf16 %v946
    %v1047 = vunpack.c.h.s8.bf16 %v947
    %v1048 = vunpack.c.h.s8.bf16 %v948
    %v1049 = vunpack.c.l.s8.bf16 %v949
    %v1050 = vunpack.c.l.s8.bf16 %v950
    %v1051 = vunpack.c.l.s8.bf16 %v951
    %v1052 = vunpack.c.l.s8.bf16 %v952
    %v1053 = vunpack.c.h.s8.bf16 %v949
    %v1054 = vunpack.c.h.s8.bf16 %v950
    %v1055 = vunpack.c.h.s8.bf16 %v951
    %v1056 = vunpack.c.h.s8.bf16 %v952
    %v1057 = vunpack.c.l.s8.bf16 %v953
    %v1058 = vunpack.c.l.s8.bf16 %v954
    %v1059 = vunpack.c.l.s8.bf16 %v955
    %v1060 = vunpack.c.l.s8.bf16 %v956
    %v1061 = vunpack.c.h.s8.bf16 %v953
    %v1062 = vunpack.c.h.s8.bf16 %v954
    %v1063 = vunpack.c.h.s8.bf16 %v955
    %v1064 = vunpack.c.h.s8.bf16 %v956
    %v1065 = vunpack.c.l.s8.bf16 %v957
    %v1066 = vunpack.c.l.s8.bf16 %v958
    %v1067 = vunpack.c.l.s8.bf16 %v959
    %v1068 = vunpack.c.l.s8.bf16 %v960
    %v1069 = vunpack.c.h.s8.bf16 %v957
    %v1070 = vunpack.c.h.s8.bf16 %v958
    %v1071 = vunpack.c.h.s8.bf16 %v959
    %v1072 = vunpack.c.h.s8.bf16 %v960
    %v1073 = vunpack.c.l.s8.bf16 %v961
    %v1074 = vunpack.c.l.s8.bf16 %v962
    %v1075 = vunpack.c.l.s8.bf16 %v963
    %v1076 = vunpack.c.l.s8.bf16 %v964
    %v1077 = vunpack.c.h.s8.bf16 %v961
    %v1078 = vunpack.c.h.s8.bf16 %v962
    %v1079 = vunpack.c.h.s8.bf16 %v963
    %v1080 = vunpack.c.h.s8.bf16 %v964
    %v1081 = vunpack.c.l.s8.bf16 %v965
    %v1082 = vunpack.c.l.s8.bf16 %v966
    %v1083 = vunpack.c.l.s8.bf16 %v967
    %v1084 = vunpack.c.l.s8.bf16 %v968
    %v1085 = vunpack.c.h.s8.bf16 %v965
    %v1086 = vunpack.c.h.s8.bf16 %v966
    %v1087 = vunpack.c.h.s8.bf16 %v967
    %v1088 = vunpack.c.h.s8.bf16 %v968
    %v1089 = vunpack.c.l.s8.bf16 %v969
    %v1090 = vunpack.c.l.s8.bf16 %v970
    %v1091 = vunpack.c.l.s8.bf16 %v971
    %v1092 = vunpack.c.l.s8.bf16 %v972
    %v1093 = vunpack.c.h.s8.bf16 %v969
    %v1094 = vunpack.c.h.s8.bf16 %v970
    %v1095 = vunpack.c.h.s8.bf16 %v971
    %v1096 = vunpack.c.h.s8.bf16 %v972
    %v1097 = vunpack.c.l.s8.bf16 %v973
    %v1098 = vunpack.c.l.s8.bf16 %v974
    %v1099 = vunpack.c.l.s8.bf16 %v975
    %v1100 = vunpack.c.l.s8.bf16 %v976
    %v1101 = vunpack.c.h.s8.bf16 %v973
    %v1102 = vunpack.c.h.s8.bf16 %v974
    %v1103 = vunpack.c.h.s8.bf16 %v975
    %v1104 = vunpack.c.h.s8.bf16 %v976
    %1105 = vmatprep.subr.bf16.mxu0 %v978
    %1106 = vmatpush1.bf16.msra.mxu0 %v977
    %1107 = vmatprep.subr.bf16.mxu0 %v982
    %1108 = vmatpush1.bf16.msra.mxu0 %v981
    %1109 = vmatprep.subr.bf16.mxu0 %v986
    %1110 = vmatpush1.bf16.msra.mxu0 %v985
    %1111 = vmatprep.subr.bf16.mxu0 %v990
    %1112 = vmatpush1.bf16.msra.mxu0 %v989
    %1113 = vmatprep.subr.bf16.mxu0 %v994
    %1114 = vmatpush1.bf16.msra.mxu0 %v993
    %1115 = vmatprep.subr.bf16.mxu0 %v998
    %1116 = vmatpush1.bf16.msra.mxu0 %v997
    %1117 = vmatprep.subr.bf16.mxu0 %v1002
    %1118 = vmatpush1.bf16.msra.mxu0 %v1001
    %1119 = vmatprep.subr.bf16.mxu0 %v1006
    %1120 = vmatpush1.bf16.msra.mxu0 %v1005
    %1121 = vmatprep.subr.bf16.mxu0 %v1010
    %1122 = vmatpush1.bf16.msra.mxu0 %v1009
    %1123 = vmatprep.subr.bf16.mxu0 %v1014
    %1124 = vmatpush1.bf16.msra.mxu0 %v1013
    %1125 = vmatprep.subr.bf16.mxu0 %v1018
    %1126 = vmatpush1.bf16.msra.mxu0 %v1017
    %1127 = vmatprep.subr.bf16.mxu0 %v1022
    %1128 = vmatpush1.bf16.msra.mxu0 %v1021
    %1129 = vmatprep.subr.bf16.mxu0 %v1026
    %1130 = vmatpush1.bf16.msra.mxu0 %v1025
    %1131 = vmatprep.subr.bf16.mxu0 %v1030
    %1132 = vmatpush1.bf16.msra.mxu0 %v1029
    %1133 = vmatprep.subr.bf16.mxu0 %v1034
    %1134 = vmatpush1.bf16.msra.mxu0 %v1033
    %1135 = vmatprep.subr.bf16.mxu0 %v1038
    %1136 = vmatpush1.bf16.msra.mxu0 %v1037
    %1137 = vmatprep.mubr.bf16.mxu0 %v910
    %1138 = vmatmul.mubr.bf16.gmra.mrb[0].mxu0 %v909
    %v1139 = vpop.f32.mrb[0].mxu0
    %v1140 = vadd.f32 0.0, %v1139
    %v1141 = vpop.f32.mrb[0].mxu0
    %v1142 = vadd.f32 0.0, %v1141
    %v1143 = vpop.f32.mrb[0].mxu0
    %v1144 = vadd.f32 0.0, %v1143
    %v1145 = vpop.f32.mrb[0].mxu0
    %v1146 = vadd.f32 0.0, %v1145
    %1147 = vdwg.mxu0
    %1148 = vmatprep.subr.bf16.mxu0 %v1042
    %1149 = vmatpush1.bf16.msra.mxu0 %v1041
    %1150 = vmatprep.subr.bf16.mxu0 %v1046
    %1151 = vmatpush1.bf16.msra.mxu0 %v1045
    %1152 = vmatprep.subr.bf16.mxu0 %v1050
    %1153 = vmatpush1.bf16.msra.mxu0 %v1049
    %1154 = vmatprep.subr.bf16.mxu0 %v1054
    %1155 = vmatpush1.bf16.msra.mxu0 %v1053
    %1156 = vmatprep.subr.bf16.mxu0 %v1058
    %1157 = vmatpush1.bf16.msra.mxu0 %v1057
    %1158 = vmatprep.subr.bf16.mxu0 %v1062
    %1159 = vmatpush1.bf16.msra.mxu0 %v1061
    %1160 = vmatprep.subr.bf16.mxu0 %v1066
    %1161 = vmatpush1.bf16.msra.mxu0 %v1065
    %1162 = vmatprep.subr.bf16.mxu0 %v1070
    %1163 = vmatpush1.bf16.msra.mxu0 %v1069
    %1164 = vmatprep.subr.bf16.mxu0 %v1074
    %1165 = vmatpush1.bf16.msra.mxu0 %v1073
    %1166 = vmatprep.subr.bf16.mxu0 %v1078
    %1167 = vmatpush1.bf16.msra.mxu0 %v1077
    %1168 = vmatprep.subr.bf16.mxu0 %v1082
    %1169 = vmatpush1.bf16.msra.mxu0 %v1081
    %1170 = vmatprep.subr.bf16.mxu0 %v1086
    %1171 = vmatpush1.bf16.msra.mxu0 %v1085
    %1172 = vmatprep.subr.bf16.mxu0 %v1090
    %1173 = vmatpush1.bf16.msra.mxu0 %v1089
    %1174 = vmatprep.subr.bf16.mxu0 %v1094
    %1175 = vmatpush1.bf16.msra.mxu0 %v1093
    %1176 = vmatprep.subr.bf16.mxu0 %v1098
    %1177 = vmatpush1.bf16.msra.mxu0 %v1097
    %1178 = vmatprep.subr.bf16.mxu0 %v1102
    %1179 = vmatpush1.bf16.msra.mxu0 %v1101
    %1180 = vmatprep.mubr.bf16.mxu0 %v912
    %1181 = vmatmul.mubr.bf16.gmra.mrb[0].mxu0 %v911
    %v1182 = vpop.f32.mrb[0].mxu0
    %v1183 = vadd.f32 %v1140, %v1182
    %v1184 = vpop.f32.mrb[0].mxu0
    %v1185 = vadd.f32 %v1142, %v1184
    %v1186 = vpop.f32.mrb[0].mxu0
    %v1187 = vadd.f32 %v1144, %v1186
    %v1188 = vpop.f32.mrb[0].mxu0
    %v1189 = vadd.f32 %v1146, %v1188
    %1190 = vdwg.mxu0
    %1191 = vmatprep.subr.bf16.mxu0 %v980
    %1192 = vmatpush1.bf16.msra.mxu0 %v979
    %1193 = vmatprep.subr.bf16.mxu0 %v984
    %1194 = vmatpush1.bf16.msra.mxu0 %v983
    %1195 = vmatprep.subr.bf16.mxu0 %v988
    %1196 = vmatpush1.bf16.msra.mxu0 %v987
    %1197 = vmatprep.subr.bf16.mxu0 %v992
    %1198 = vmatpush1.bf16.msra.mxu0 %v991
    %1199 = vmatprep.subr.bf16.mxu0 %v996
    %1200 = vmatpush1.bf16.msra.mxu0 %v995
    %1201 = vmatprep.subr.bf16.mxu0 %v1000
    %1202 = vmatpush1.bf16.msra.mxu0 %v999
    %1203 = vmatprep.subr.bf16.mxu0 %v1004
    %1204 = vmatpush1.bf16.msra.mxu0 %v1003
    %1205 = vmatprep.subr.bf16.mxu0 %v1008
    %1206 = vmatpush1.bf16.msra.mxu0 %v1007
    %1207 = vmatprep.subr.bf16.mxu0 %v1012
    %1208 = vmatpush1.bf16.msra.mxu0 %v1011
    %1209 = vmatprep.subr.bf16.mxu0 %v1016
    %1210 = vmatpush1.bf16.msra.mxu0 %v1015
    %1211 = vmatprep.subr.bf16.mxu0 %v1020
    %1212 = vmatpush1.bf16.msra.mxu0 %v1019
    %1213 = vmatprep.subr.bf16.mxu0 %v1024
    %1214 = vmatpush1.bf16.msra.mxu0 %v1023
    %1215 = vmatprep.subr.bf16.mxu0 %v1028
    %1216 = vmatpush1.bf16.msra.mxu0 %v1027
    %1217 = vmatprep.subr.bf16.mxu0 %v1032
    %1218 = vmatpush1.bf16.msra.mxu0 %v1031
    %1219 = vmatprep.subr.bf16.mxu0 %v1036
    %1220 = vmatpush1.bf16.msra.mxu0 %v1035
    %1221 = vmatprep.subr.bf16.mxu0 %v1040
    %1222 = vmatpush1.bf16.msra.mxu0 %v1039
    %1223 = vmatprep.mubr.bf16.mxu0 %v910
    %1224 = vmatmul.mubr.bf16.gmra.mrb[0].mxu0 %v909
    %v1225 = vpop.f32.mrb[0].mxu0
    %v1226 = vadd.f32 0.0, %v1225
    %v1227 = vpop.f32.mrb[0].mxu0
    %v1228 = vadd.f32 0.0, %v1227
    %v1229 = vpop.f32.mrb[0].mxu0
    %v1230 = vadd.f32 0.0, %v1229
    %v1231 = vpop.f32.mrb[0].mxu0
    %v1232 = vadd.f32 0.0, %v1231
    %1233 = vdwg.mxu0
    %1234 = vmatprep.subr.bf16.mxu0 %v1044
    %1235 = vmatpush1.bf16.msra.mxu0 %v1043
    %1236 = vmatprep.subr.bf16.mxu0 %v1048
    %1237 = vmatpush1.bf16.msra.mxu0 %v1047
    %1238 = vmatprep.subr.bf16.mxu0 %v1052
    %1239 = vmatpush1.bf16.msra.mxu0 %v1051
    %1240 = vmatprep.subr.bf16.mxu0 %v1056
    %1241 = vmatpush1.bf16.msra.mxu0 %v1055
    %1242 = vmatprep.subr.bf16.mxu0 %v1060
    %1243 = vmatpush1.bf16.msra.mxu0 %v1059
    %1244 = vmatprep.subr.bf16.mxu0 %v1064
    %1245 = vmatpush1.bf16.msra.mxu0 %v1063
    %1246 = vmatprep.subr.bf16.mxu0 %v1068
    %1247 = vmatpush1.bf16.msra.mxu0 %v1067
    %1248 = vmatprep.subr.bf16.mxu0 %v1072
    %1249 = vmatpush1.bf16.msra.mxu0 %v1071
    %1250 = vmatprep.subr.bf16.mxu0 %v1076
    %1251 = vmatpush1.bf16.msra.mxu0 %v1075
    %1252 = vmatprep.subr.bf16.mxu0 %v1080
    %1253 = vmatpush1.bf16.msra.mxu0 %v1079
    %1254 = vmatprep.subr.bf16.mxu0 %v1084
    %1255 = vmatpush1.bf16.msra.mxu0 %v1083
    %1256 = vmatprep.subr.bf16.mxu0 %v1088
    %1257 = vmatpush1.bf16.msra.mxu0 %v1087
    %1258 = vmatprep.subr.bf16.mxu0 %v1092
    %1259 = vmatpush1.bf16.msra.mxu0 %v1091
    %1260 = vmatprep.subr.bf16.mxu0 %v1096
    %1261 = vmatpush1.bf16.msra.mxu0 %v1095
    %1262 = vmatprep.subr.bf16.mxu0 %v1100
    %1263 = vmatpush1.bf16.msra.mxu0 %v1099
    %1264 = vmatprep.subr.bf16.mxu0 %v1104
    %1265 = vmatpush1.bf16.msra.mxu0 %v1103
    %1266 = vmatprep.mubr.bf16.mxu0 %v912
    %1267 = vmatmul.mubr.bf16.gmra.mrb[0].mxu0 %v911
    %v1268 = vpop.f32.mrb[0].mxu0
    %v1269 = vadd.f32 %v1226, %v1268
    %v1270 = vpop.f32.mrb[0].mxu0
    %v1271 = vadd.f32 %v1228, %v1270
    %v1272 = vpop.f32.mrb[0].mxu0
    %v1273 = vadd.f32 %v1230, %v1272
    %v1274 = vpop.f32.mrb[0].mxu0
    %v1275 = vadd.f32 %v1232, %v1274
    %1276 = vdwg.mxu0
    %v1277 = vld [vmem:[#allocation8] sm:$0xff]
    %v1278 = vld [vmem:[#allocation8 + $0x8] sm:$0xff]
    %v1279 = vld [vmem:[#allocation8 + $0x10] sm:$0xff]
    %v1280 = vld [vmem:[#allocation8 + $0x18] sm:$0xff]
    %v1281 = vld [vmem:[#allocation8 + $0x20] sm:$0x3]
    %v1282 = vld [vmem:[#allocation8 + $0x28] sm:$0x3]
    %v1283 = vld [vmem:[#allocation8 + $0x30] sm:$0x3]
    %v1284 = vld [vmem:[#allocation8 + $0x38] sm:$0x3]
    %v1285 = vmul.f32 %v1183, %v1277
    %v1286 = vmul.f32 %v1185, %v1278
    %v1287 = vmul.f32 %v1269, %v1279
    %v1288 = vmul.f32 %v1271, %v1280
    %v1289 = vmul.f32 %v1187, %v1281
    %v1290 = vmul.f32 %v1189, %v1282
    %v1291 = vmul.f32 %v1273, %v1283
    %v1292 = vmul.f32 %v1275, %v1284
    %v1293 = vld [vmem:[#allocation10] sm:$0xff]
    %v1294 = vld [vmem:[#allocation10 + $0x8] sm:$0xff]
    %v1295 = vld [vmem:[#allocation10 + $0x10] sm:$0xff]
    %v1296 = vld [vmem:[#allocation10 + $0x18] sm:$0xff]
    %v1297 = vld [vmem:[#allocation10 + $0x20] sm:$0x3]
    %v1298 = vld [vmem:[#allocation10 + $0x28] sm:$0x3]
    %v1299 = vld [vmem:[#allocation10 + $0x30] sm:$0x3]
    %v1300 = vld [vmem:[#allocation10 + $0x38] sm:$0x3]
    %v1301 = vadd.f32 %v1285, %v1293
    %v1302 = vadd.f32 %v1286, %v1294
    %v1303 = vadd.f32 %v1287, %v1295
    %v1304 = vadd.f32 %v1288, %v1296
    %v1305 = vadd.f32 %v1289, %v1297
    %v1306 = vadd.f32 %v1290, %v1298
    %v1307 = vadd.f32 %v1291, %v1299
    %v1308 = vadd.f32 %v1292, %v1300
    %v1309 = vmax.f32 %v1301, 0.0
    %v1310 = vmax.f32 %v1302, 0.0
    %v1311 = vmax.f32 %v1303, 0.0
    %v1312 = vmax.f32 %v1304, 0.0
    %v1313 = vmax.f32 %v1305, 0.0
    %v1314 = vmax.f32 %v1306, 0.0
    %v1315 = vmax.f32 %v1307, 0.0
    %v1316 = vmax.f32 %v1308, 0.0
    %v1317 = vpack.c.bf16 %v1313, %v1309
    %v1318 = vpack.c.bf16 %v1314, %v1310
    %v1319 = vpack.c.bf16 %v1315, %v1311
    %v1320 = vpack.c.bf16 %v1316, %v1312
    %v1321 = vld [vmem:[%s1] sm:$0x1]
    %vm1322 = vcmask 80896
    %v1324 = vsel %vm1322, %v1321, 0
    %vm1326 = vcmask 1044480
    %v1328 = vsel %vm1326, %v1317, 0
    %v1331 = vsel %vm1326, %v1318, 0
    %v1334 = vsel %vm1326, %v1319, 0
    %v1337 = vsel %vm1326, %v1320, 0
    %1339 = vmatprep.subr.bf16.mxu0 %v1331
    %1340 = vmatpush1.bf16.msra.mxu0 %v1328
    %1341 = vmatprep.subr.bf16.mxu0 0
    %1342 = vmatpush1.bf16.msra.mxu0 0
    %1343 = vmatprep.subr.bf16.mxu0 0
    %1344 = vmatpush1.bf16.msra.mxu0 0
    %1345 = vmatprep.subr.bf16.mxu0 0
    %1346 = vmatpush1.bf16.msra.mxu0 0
    %1347 = vmatprep.subr.bf16.mxu0 0
    %1348 = vmatpush1.bf16.msra.mxu0 0
    %1349 = vmatprep.subr.bf16.mxu0 0
    %1350 = vmatpush1.bf16.msra.mxu0 0
    %1351 = vmatprep.subr.bf16.mxu0 0
    %1352 = vmatpush1.bf16.msra.mxu0 0
    %1353 = vmatprep.subr.bf16.mxu0 0
    %1354 = vmatpush1.bf16.msra.mxu0 0
    %1355 = vmatprep.subr.bf16.mxu0 0
    %1356 = vmatpush1.bf16.msra.mxu0 0
    %1357 = vmatprep.subr.bf16.mxu0 0
    %1358 = vmatpush1.bf16.msra.mxu0 0
    %1359 = vmatprep.subr.bf16.mxu0 0
    %1360 = vmatpush1.bf16.msra.mxu0 0
    %1361 = vmatprep.subr.bf16.mxu0 0
    %1362 = vmatpush1.bf16.msra.mxu0 0
    %1363 = vmatprep.subr.bf16.mxu0 0
    %1364 = vmatpush1.bf16.msra.mxu0 0
    %1365 = vmatprep.subr.bf16.mxu0 0
    %1366 = vmatpush1.bf16.msra.mxu0 0
    %1367 = vmatprep.subr.bf16.mxu0 0
    %1368 = vmatpush1.bf16.msra.mxu0 0
    %1369 = vmatprep.subr.bf16.mxu0 0
    %1370 = vmatpush1.bf16.msra.mxu0 0
    %1371 = vmatprep.mubr.bf16.mxu0 0
    %1372 = vmatmul.mubr.bf16.gmra.mrb[0].mxu0 %v1324
    %v1373 = vpop.f32.mrb[0].mxu0
    %v1374 = vadd.f32 0.0, %v1373
    %v1375 = vpop.f32.mrb[0].mxu0
    %v1376 = vadd.f32 0.0, %v1375
    %v1377 = vpop.f32.mrb[0].mxu0
    %v1378 = vpop.f32.mrb[0].mxu0
    %1379 = vdwg.mxu0
    %1380 = vmatprep.subr.bf16.mxu0 %v1337
    %1381 = vmatpush1.bf16.msra.mxu0 %v1334
    %1382 = vmatprep.subr.bf16.mxu0 0
    %1383 = vmatpush1.bf16.msra.mxu0 0
    %1384 = vmatprep.subr.bf16.mxu0 0
    %1385 = vmatpush1.bf16.msra.mxu0 0
    %1386 = vmatprep.subr.bf16.mxu0 0
    %1387 = vmatpush1.bf16.msra.mxu0 0
    %1388 = vmatprep.subr.bf16.mxu0 0
    %1389 = vmatpush1.bf16.msra.mxu0 0
    %1390 = vmatprep.subr.bf16.mxu0 0
    %1391 = vmatpush1.bf16.msra.mxu0 0
    %1392 = vmatprep.subr.bf16.mxu0 0
    %1393 = vmatpush1.bf16.msra.mxu0 0
    %1394 = vmatprep.subr.bf16.mxu0 0
    %1395 = vmatpush1.bf16.msra.mxu0 0
    %1396 = vmatprep.subr.bf16.mxu0 0
    %1397 = vmatpush1.bf16.msra.mxu0 0
    %1398 = vmatprep.subr.bf16.mxu0 0
    %1399 = vmatpush1.bf16.msra.mxu0 0
    %1400 = vmatprep.subr.bf16.mxu0 0
    %1401 = vmatpush1.bf16.msra.mxu0 0
    %1402 = vmatprep.subr.bf16.mxu0 0
    %1403 = vmatpush1.bf16.msra.mxu0 0
    %1404 = vmatprep.subr.bf16.mxu0 0
    %1405 = vmatpush1.bf16.msra.mxu0 0
    %1406 = vmatprep.subr.bf16.mxu0 0
    %1407 = vmatpush1.bf16.msra.mxu0 0
    %1408 = vmatprep.subr.bf16.mxu0 0
    %1409 = vmatpush1.bf16.msra.mxu0 0
    %1410 = vmatprep.subr.bf16.mxu0 0
    %1411 = vmatpush1.bf16.msra.mxu0 0
    %1412 = vmatprep.mubr.bf16.mxu0 0
    %1413 = vmatmul.mubr.bf16.gmra.mrb[0].mxu0 %v1324
    %v1414 = vpop.f32.mrb[0].mxu0
    %v1415 = vadd.f32 0.0, %v1414
    %v1416 = vpop.f32.mrb[0].mxu0
    %v1417 = vadd.f32 0.0, %v1416
    %v1418 = vpop.f32.mrb[0].mxu0
    %v1419 = vpop.f32.mrb[0].mxu0
    %1420 = vdwg.mxu0
    %v1421 = vmul.f32 %v1374, 0.2
    %v1422 = vmul.f32 %v1376, 0.2
    %v1423 = vmul.f32 %v1415, 0.2
    %v1424 = vmul.f32 %v1417, 0.2
    %v1425 = vpack.c.bf16 %v1421, %v1421
    %v1426 = vpack.c.bf16 %v1422, %v1422
    %v1427 = vpack.c.bf16 %v1423, %v1423
    %v1428 = vpack.c.bf16 %v1424, %v1424
    %v1429 = vld [vmem:[%s8] sm:$0xff]
    %v1430 = vld [vmem:[%s8 + $0x8] sm:$0xff]
    %v1431 = vld [vmem:[%s8 + $0x10] sm:$0xff]
    %v1432 = vld [vmem:[%s8 + $0x18] sm:$0xff]
    %v1433 = vld [vmem:[%s8 + $0x20] sm:$0xff]
    %v1434 = vld [vmem:[%s8 + $0x28] sm:$0xff]
    %v1435 = vld [vmem:[%s8 + $0x30] sm:$0xff]
    %v1436 = vld [vmem:[%s8 + $0x38] sm:$0xff]
    %v1437 = vld [vmem:[%s8 + $0x40] sm:$0xff]
    %v1438 = vld [vmem:[%s8 + $0x48] sm:$0xff]
    %v1439 = vld [vmem:[%s8 + $0x50] sm:$0xff]
    %v1440 = vld [vmem:[%s8 + $0x58] sm:$0xff]
    %v1441 = vld [vmem:[%s8 + $0x60] sm:$0xff]
    %v1442 = vld [vmem:[%s8 + $0x68] sm:$0xff]
    %v1443 = vld [vmem:[%s8 + $0x70] sm:$0xff]
    %v1444 = vld [vmem:[%s8 + $0x78] sm:$0xff]
    %v1445 = vld [vmem:[%s8 + $0x80] sm:$0xff]
    %v1446 = vld [vmem:[%s8 + $0x88] sm:$0xff]
    %v1447 = vld [vmem:[%s8 + $0x90] sm:$0xff]
    %v1448 = vld [vmem:[%s8 + $0x98] sm:$0xff]
    %v1449 = vld [vmem:[%s8 + $0xa0] sm:$0xff]
    %v1450 = vld [vmem:[%s8 + $0xa8] sm:$0xff]
    %v1451 = vld [vmem:[%s8 + $0xb0] sm:$0xff]
    %v1452 = vld [vmem:[%s8 + $0xb8] sm:$0xff]
    %v1453 = vld [vmem:[%s8 + $0xc0] sm:$0xff]
    %v1454 = vld [vmem:[%s8 + $0xc8] sm:$0xff]
    %v1455 = vld [vmem:[%s8 + $0xd0] sm:$0xff]
    %v1456 = vld [vmem:[%s8 + $0xd8] sm:$0xff]
    %v1457 = vld [vmem:[%s8 + $0xe0] sm:$0xff]
    %v1458 = vld [vmem:[%s8 + $0xe8] sm:$0xff]
    %v1459 = vld [vmem:[%s8 + $0xf0] sm:$0xff]
    %v1460 = vld [vmem:[%s8 + $0xf8] sm:$0xff]
    %v1461 = vld [vmem:[%s8 + $0x100] sm:$0xff]
    %v1462 = vld [vmem:[%s8 + $0x108] sm:$0xff]
    %v1463 = vld [vmem:[%s8 + $0x110] sm:$0xff]
    %v1464 = vld [vmem:[%s8 + $0x118] sm:$0xff]
    %v1465 = vld [vmem:[%s8 + $0x120] sm:$0xff]
    %v1466 = vld [vmem:[%s8 + $0x128] sm:$0xff]
    %v1467 = vld [vmem:[%s8 + $0x130] sm:$0xff]
    %v1468 = vld [vmem:[%s8 + $0x138] sm:$0xff]
    %v1469 = vld [vmem:[%s8 + $0x140] sm:$0xff]
    %v1470 = vld [vmem:[%s8 + $0x148] sm:$0xff]
    %v1471 = vld [vmem:[%s8 + $0x150] sm:$0xff]
    %v1472 = vld [vmem:[%s8 + $0x158] sm:$0xff]
    %v1473 = vld [vmem:[%s8 + $0x160] sm:$0xff]
    %v1474 = vld [vmem:[%s8 + $0x168] sm:$0xff]
    %v1475 = vld [vmem:[%s8 + $0x170] sm:$0xff]
    %v1476 = vld [vmem:[%s8 + $0x178] sm:$0xff]
    %v1477 = vld [vmem:[%s8 + $0x180] sm:$0xff]
    %v1478 = vld [vmem:[%s8 + $0x188] sm:$0xff]
    %v1479 = vld [vmem:[%s8 + $0x190] sm:$0xff]
    %v1480 = vld [vmem:[%s8 + $0x198] sm:$0xff]
    %v1481 = vld [vmem:[%s8 + $0x1a0] sm:$0xff]
    %v1482 = vld [vmem:[%s8 + $0x1a8] sm:$0xff]
    %v1483 = vld [vmem:[%s8 + $0x1b0] sm:$0xff]
    %v1484 = vld [vmem:[%s8 + $0x1b8] sm:$0xff]
    %v1485 = vld [vmem:[%s8 + $0x1c0] sm:$0xff]
    %v1486 = vld [vmem:[%s8 + $0x1c8] sm:$0xff]
    %v1487 = vld [vmem:[%s8 + $0x1d0] sm:$0xff]
    %v1488 = vld [vmem:[%s8 + $0x1d8] sm:$0xff]
    %v1489 = vld [vmem:[%s8 + $0x1e0] sm:$0xff]
    %v1490 = vld [vmem:[%s8 + $0x1e8] sm:$0xff]
    %v1491 = vld [vmem:[%s8 + $0x1f0] sm:$0xff]
    %v1492 = vld [vmem:[%s8 + $0x1f8] sm:$0xff]
    %v1493 = vld [vmem:[%s8 + $0x200] sm:$0xff]
    %v1494 = vld [vmem:[%s8 + $0x208] sm:$0xff]
    %v1495 = vld [vmem:[%s8 + $0x210] sm:$0xff]
    %v1496 = vld [vmem:[%s8 + $0x218] sm:$0xff]
    %v1497 = vld [vmem:[%s8 + $0x220] sm:$0xff]
    %v1498 = vld [vmem:[%s8 + $0x228] sm:$0xff]
    %v1499 = vld [vmem:[%s8 + $0x230] sm:$0xff]
    %v1500 = vld [vmem:[%s8 + $0x238] sm:$0xff]
    %v1501 = vld [vmem:[%s8 + $0x240] sm:$0xff]
    %v1502 = vld [vmem:[%s8 + $0x248] sm:$0xff]
    %v1503 = vld [vmem:[%s8 + $0x250] sm:$0xff]
    %v1504 = vld [vmem:[%s8 + $0x258] sm:$0xff]
    %v1505 = vld [vmem:[%s8 + $0x260] sm:$0xff]
    %v1506 = vld [vmem:[%s8 + $0x268] sm:$0xff]
    %v1507 = vld [vmem:[%s8 + $0x270] sm:$0xff]
    %v1508 = vld [vmem:[%s8 + $0x278] sm:$0xff]
    %v1509 = vunpack.c.l.s8.bf16 %v1429
    %v1510 = vunpack.c.l.s8.bf16 %v1430
    %v1511 = vunpack.c.l.s8.bf16 %v1431
    %v1512 = vunpack.c.l.s8.bf16 %v1432
    %v1513 = vunpack.c.l.s8.bf16 %v1433
    %v1514 = vunpack.c.h.s8.bf16 %v1429
    %v1515 = vunpack.c.h.s8.bf16 %v1430
    %v1516 = vunpack.c.h.s8.bf16 %v1431
    %v1517 = vunpack.c.h.s8.bf16 %v1432
    %v1518 = vunpack.c.h.s8.bf16 %v1433
    %v1519 = vunpack.c.l.s8.bf16 %v1434
    %v1520 = vunpack.c.l.s8.bf16 %v1435
    %v1521 = vunpack.c.l.s8.bf16 %v1436
    %v1522 = vunpack.c.l.s8.bf16 %v1437
    %v1523 = vunpack.c.l.s8.bf16 %v1438
    %v1524 = vunpack.c.h.s8.bf16 %v1434
    %v1525 = vunpack.c.h.s8.bf16 %v1435
    %v1526 = vunpack.c.h.s8.bf16 %v1436
    %v1527 = vunpack.c.h.s8.bf16 %v1437
    %v1528 = vunpack.c.h.s8.bf16 %v1438
    %v1529 = vunpack.c.l.s8.bf16 %v1439
    %v1530 = vunpack.c.l.s8.bf16 %v1440
    %v1531 = vunpack.c.l.s8.bf16 %v1441
    %v1532 = vunpack.c.l.s8.bf16 %v1442
    %v1533 = vunpack.c.l.s8.bf16 %v1443
    %v1534 = vunpack.c.h.s8.bf16 %v1439
    %v1535 = vunpack.c.h.s8.bf16 %v1440
    %v1536 = vunpack.c.h.s8.bf16 %v1441
    %v1537 = vunpack.c.h.s8.bf16 %v1442
    %v1538 = vunpack.c.h.s8.bf16 %v1443
    %v1539 = vunpack.c.l.s8.bf16 %v1444
    %v1540 = vunpack.c.l.s8.bf16 %v1445
    %v1541 = vunpack.c.l.s8.bf16 %v1446
    %v1542 = vunpack.c.l.s8.bf16 %v1447
    %v1543 = vunpack.c.l.s8.bf16 %v1448
    %v1544 = vunpack.c.h.s8.bf16 %v1444
    %v1545 = vunpack.c.h.s8.bf16 %v1445
    %v1546 = vunpack.c.h.s8.bf16 %v1446
    %v1547 = vunpack.c.h.s8.bf16 %v1447
    %v1548 = vunpack.c.h.s8.bf16 %v1448
    %v1549 = vunpack.c.l.s8.bf16 %v1449
    %v1550 = vunpack.c.l.s8.bf16 %v1450
    %v1551 = vunpack.c.l.s8.bf16 %v1451
    %v1552 = vunpack.c.l.s8.bf16 %v1452
    %v1553 = vunpack.c.l.s8.bf16 %v1453
    %v1554 = vunpack.c.h.s8.bf16 %v1449
    %v1555 = vunpack.c.h.s8.bf16 %v1450
    %v1556 = vunpack.c.h.s8.bf16 %v1451
    %v1557 = vunpack.c.h.s8.bf16 %v1452
    %v1558 = vunpack.c.h.s8.bf16 %v1453
    %v1559 = vunpack.c.l.s8.bf16 %v1454
    %v1560 = vunpack.c.l.s8.bf16 %v1455
    %v1561 = vunpack.c.l.s8.bf16 %v1456
    %v1562 = vunpack.c.l.s8.bf16 %v1457
    %v1563 = vunpack.c.l.s8.bf16 %v1458
    %v1564 = vunpack.c.h.s8.bf16 %v1454
    %v1565 = vunpack.c.h.s8.bf16 %v1455
    %v1566 = vunpack.c.h.s8.bf16 %v1456
    %v1567 = vunpack.c.h.s8.bf16 %v1457
    %v1568 = vunpack.c.h.s8.bf16 %v1458
    %v1569 = vunpack.c.l.s8.bf16 %v1459
    %v1570 = vunpack.c.l.s8.bf16 %v1460
    %v1571 = vunpack.c.l.s8.bf16 %v1461
    %v1572 = vunpack.c.l.s8.bf16 %v1462
    %v1573 = vunpack.c.l.s8.bf16 %v1463
    %v1574 = vunpack.c.h.s8.bf16 %v1459
    %v1575 = vunpack.c.h.s8.bf16 %v1460
    %v1576 = vunpack.c.h.s8.bf16 %v1461
    %v1577 = vunpack.c.h.s8.bf16 %v1462
    %v1578 = vunpack.c.h.s8.bf16 %v1463
    %v1579 = vunpack.c.l.s8.bf16 %v1464
    %v1580 = vunpack.c.l.s8.bf16 %v1465
    %v1581 = vunpack.c.l.s8.bf16 %v1466
    %v1582 = vunpack.c.l.s8.bf16 %v1467
    %v1583 = vunpack.c.l.s8.bf16 %v1468
    %v1584 = vunpack.c.h.s8.bf16 %v1464
    %v1585 = vunpack.c.h.s8.bf16 %v1465
    %v1586 = vunpack.c.h.s8.bf16 %v1466
    %v1587 = vunpack.c.h.s8.bf16 %v1467
    %v1588 = vunpack.c.h.s8.bf16 %v1468
    %v1589 = vunpack.c.l.s8.bf16 %v1469
    %v1590 = vunpack.c.l.s8.bf16 %v1470
    %v1591 = vunpack.c.l.s8.bf16 %v1471
    %v1592 = vunpack.c.l.s8.bf16 %v1472
    %v1593 = vunpack.c.l.s8.bf16 %v1473
    %v1594 = vunpack.c.h.s8.bf16 %v1469
    %v1595 = vunpack.c.h.s8.bf16 %v1470
    %v1596 = vunpack.c.h.s8.bf16 %v1471
    %v1597 = vunpack.c.h.s8.bf16 %v1472
    %v1598 = vunpack.c.h.s8.bf16 %v1473
    %v1599 = vunpack.c.l.s8.bf16 %v1474
    %v1600 = vunpack.c.l.s8.bf16 %v1475
    %v1601 = vunpack.c.l.s8.bf16 %v1476
    %v1602 = vunpack.c.l.s8.bf16 %v1477
    %v1603 = vunpack.c.l.s8.bf16 %v1478
    %v1604 = vunpack.c.h.s8.bf16 %v1474
    %v1605 = vunpack.c.h.s8.bf16 %v1475
    %v1606 = vunpack.c.h.s8.bf16 %v1476
    %v1607 = vunpack.c.h.s8.bf16 %v1477
    %v1608 = vunpack.c.h.s8.bf16 %v1478
    %v1609 = vunpack.c.l.s8.bf16 %v1479
    %v1610 = vunpack.c.l.s8.bf16 %v1480
    %v1611 = vunpack.c.l.s8.bf16 %v1481
    %v1612 = vunpack.c.l.s8.bf16 %v1482
    %v1613 = vunpack.c.l.s8.bf16 %v1483
    %v1614 = vunpack.c.h.s8.bf16 %v1479
    %v1615 = vunpack.c.h.s8.bf16 %v1480
    %v1616 = vunpack.c.h.s8.bf16 %v1481
    %v1617 = vunpack.c.h.s8.bf16 %v1482
    %v1618 = vunpack.c.h.s8.bf16 %v1483
    %v1619 = vunpack.c.l.s8.bf16 %v1484
    %v1620 = vunpack.c.l.s8.bf16 %v1485
    %v1621 = vunpack.c.l.s8.bf16 %v1486
    %v1622 = vunpack.c.l.s8.bf16 %v1487
    %v1623 = vunpack.c.l.s8.bf16 %v1488
    %v1624 = vunpack.c.h.s8.bf16 %v1484
    %v1625 = vunpack.c.h.s8.bf16 %v1485
    %v1626 = vunpack.c.h.s8.bf16 %v1486
    %v1627 = vunpack.c.h.s8.bf16 %v1487
    %v1628 = vunpack.c.h.s8.bf16 %v1488
    %v1629 = vunpack.c.l.s8.bf16 %v1489
    %v1630 = vunpack.c.l.s8.bf16 %v1490
    %v1631 = vunpack.c.l.s8.bf16 %v1491
    %v1632 = vunpack.c.l.s8.bf16 %v1492
    %v1633 = vunpack.c.l.s8.bf16 %v1493
    %v1634 = vunpack.c.h.s8.bf16 %v1489
    %v1635 = vunpack.c.h.s8.bf16 %v1490
    %v1636 = vunpack.c.h.s8.bf16 %v1491
    %v1637 = vunpack.c.h.s8.bf16 %v1492
    %v1638 = vunpack.c.h.s8.bf16 %v1493
    %v1639 = vunpack.c.l.s8.bf16 %v1494
    %v1640 = vunpack.c.l.s8.bf16 %v1495
    %v1641 = vunpack.c.l.s8.bf16 %v1496
    %v1642 = vunpack.c.l.s8.bf16 %v1497
    %v1643 = vunpack.c.l.s8.bf16 %v1498
    %v1644 = vunpack.c.h.s8.bf16 %v1494
    %v1645 = vunpack.c.h.s8.bf16 %v1495
    %v1646 = vunpack.c.h.s8.bf16 %v1496
    %v1647 = vunpack.c.h.s8.bf16 %v1497
    %v1648 = vunpack.c.h.s8.bf16 %v1498
    %v1649 = vunpack.c.l.s8.bf16 %v1499
    %v1650 = vunpack.c.l.s8.bf16 %v1500
    %v1651 = vunpack.c.l.s8.bf16 %v1501
    %v1652 = vunpack.c.l.s8.bf16 %v1502
    %v1653 = vunpack.c.l.s8.bf16 %v1503
    %v1654 = vunpack.c.h.s8.bf16 %v1499
    %v1655 = vunpack.c.h.s8.bf16 %v1500
    %v1656 = vunpack.c.h.s8.bf16 %v1501
    %v1657 = vunpack.c.h.s8.bf16 %v1502
    %v1658 = vunpack.c.h.s8.bf16 %v1503
    %v1659 = vunpack.c.l.s8.bf16 %v1504
    %v1660 = vunpack.c.l.s8.bf16 %v1505
    %v1661 = vunpack.c.l.s8.bf16 %v1506
    %v1662 = vunpack.c.l.s8.bf16 %v1507
    %v1663 = vunpack.c.l.s8.bf16 %v1508
    %v1664 = vunpack.c.h.s8.bf16 %v1504
    %v1665 = vunpack.c.h.s8.bf16 %v1505
    %v1666 = vunpack.c.h.s8.bf16 %v1506
    %v1667 = vunpack.c.h.s8.bf16 %v1507
    %v1668 = vunpack.c.h.s8.bf16 %v1508
    %1669 = vmatprep.subr.bf16.mxu0 %v1510
    %1670 = vmatpush1.bf16.msra.mxu0 %v1509
    %1671 = vmatprep.subr.bf16.mxu0 %v1515
    %1672 = vmatpush1.bf16.msra.mxu0 %v1514
    %1673 = vmatprep.subr.bf16.mxu0 %v1520
    %1674 = vmatpush1.bf16.msra.mxu0 %v1519
    %1675 = vmatprep.subr.bf16.mxu0 %v1525
    %1676 = vmatpush1.bf16.msra.mxu0 %v1524
    %1677 = vmatprep.subr.bf16.mxu0 %v1530
    %1678 = vmatpush1.bf16.msra.mxu0 %v1529
    %1679 = vmatprep.subr.bf16.mxu0 %v1535
    %1680 = vmatpush1.bf16.msra.mxu0 %v1534
    %1681 = vmatprep.subr.bf16.mxu0 %v1540
    %1682 = vmatpush1.bf16.msra.mxu0 %v1539
    %1683 = vmatprep.subr.bf16.mxu0 %v1545
    %1684 = vmatpush1.bf16.msra.mxu0 %v1544
    %1685 = vmatprep.subr.bf16.mxu0 %v1550
    %1686 = vmatpush1.bf16.msra.mxu0 %v1549
    %1687 = vmatprep.subr.bf16.mxu0 %v1555
    %1688 = vmatpush1.bf16.msra.mxu0 %v1554
    %1689 = vmatprep.subr.bf16.mxu0 %v1560
    %1690 = vmatpush1.bf16.msra.mxu0 %v1559
    %1691 = vmatprep.subr.bf16.mxu0 %v1565
    %1692 = vmatpush1.bf16.msra.mxu0 %v1564
    %1693 = vmatprep.subr.bf16.mxu0 %v1570
    %1694 = vmatpush1.bf16.msra.mxu0 %v1569
    %1695 = vmatprep.subr.bf16.mxu0 %v1575
    %1696 = vmatpush1.bf16.msra.mxu0 %v1574
    %1697 = vmatprep.subr.bf16.mxu0 %v1580
    %1698 = vmatpush1.bf16.msra.mxu0 %v1579
    %1699 = vmatprep.subr.bf16.mxu0 %v1585
    %1700 = vmatpush1.bf16.msra.mxu0 %v1584
    %1701 = vmatprep.mubr.bf16.mxu0 %v1426
    %1702 = vmatmul.mubr.bf16.gmra.mrb[0].mxu0 %v1425
    %v1703 = vpop.f32.mrb[0].mxu0
    %v1704 = vadd.f32 0.0, %v1703
    %v1705 = vpop.f32.mrb[0].mxu0
    %v1706 = vadd.f32 0.0, %v1705
    %v1707 = vpop.f32.mrb[0].mxu0
    %v1708 = vpop.f32.mrb[0].mxu0
    %1709 = vdwg.mxu0
    %1710 = vmatprep.subr.bf16.mxu0 %v1590
    %1711 = vmatpush1.bf16.msra.mxu0 %v1589
    %1712 = vmatprep.subr.bf16.mxu0 %v1595
    %1713 = vmatpush1.bf16.msra.mxu0 %v1594
    %1714 = vmatprep.subr.bf16.mxu0 %v1600
    %1715 = vmatpush1.bf16.msra.mxu0 %v1599
    %1716 = vmatprep.subr.bf16.mxu0 %v1605
    %1717 = vmatpush1.bf16.msra.mxu0 %v1604
    %1718 = vmatprep.subr.bf16.mxu0 %v1610
    %1719 = vmatpush1.bf16.msra.mxu0 %v1609
    %1720 = vmatprep.subr.bf16.mxu0 %v1615
    %1721 = vmatpush1.bf16.msra.mxu0 %v1614
    %1722 = vmatprep.subr.bf16.mxu0 %v1620
    %1723 = vmatpush1.bf16.msra.mxu0 %v1619
    %1724 = vmatprep.subr.bf16.mxu0 %v1625
    %1725 = vmatpush1.bf16.msra.mxu0 %v1624
    %1726 = vmatprep.subr.bf16.mxu0 %v1630
    %1727 = vmatpush1.bf16.msra.mxu0 %v1629
    %1728 = vmatprep.subr.bf16.mxu0 %v1635
    %1729 = vmatpush1.bf16.msra.mxu0 %v1634
    %1730 = vmatprep.subr.bf16.mxu0 %v1640
    %1731 = vmatpush1.bf16.msra.mxu0 %v1639
    %1732 = vmatprep.subr.bf16.mxu0 %v1645
    %1733 = vmatpush1.bf16.msra.mxu0 %v1644
    %1734 = vmatprep.subr.bf16.mxu0 %v1650
    %1735 = vmatpush1.bf16.msra.mxu0 %v1649
    %1736 = vmatprep.subr.bf16.mxu0 %v1655
    %1737 = vmatpush1.bf16.msra.mxu0 %v1654
    %1738 = vmatprep.subr.bf16.mxu0 %v1660
    %1739 = vmatpush1.bf16.msra.mxu0 %v1659
    %1740 = vmatprep.subr.bf16.mxu0 %v1665
    %1741 = vmatpush1.bf16.msra.mxu0 %v1664
    %1742 = vmatprep.mubr.bf16.mxu0 %v1428
    %1743 = vmatmul.mubr.bf16.gmra.mrb[0].mxu0 %v1427
    %v1744 = vpop.f32.mrb[0].mxu0
    %v1745 = vadd.f32 %v1704, %v1744
    %v1746 = vpop.f32.mrb[0].mxu0
    %v1747 = vadd.f32 %v1706, %v1746
    %v1748 = vpop.f32.mrb[0].mxu0
    %v1749 = vpop.f32.mrb[0].mxu0
    %1750 = vdwg.mxu0
    %1751 = vmatprep.subr.bf16.mxu0 %v1512
    %1752 = vmatpush1.bf16.msra.mxu0 %v1511
    %1753 = vmatprep.subr.bf16.mxu0 %v1517
    %1754 = vmatpush1.bf16.msra.mxu0 %v1516
    %1755 = vmatprep.subr.bf16.mxu0 %v1522
    %1756 = vmatpush1.bf16.msra.mxu0 %v1521
    %1757 = vmatprep.subr.bf16.mxu0 %v1527
    %1758 = vmatpush1.bf16.msra.mxu0 %v1526
    %1759 = vmatprep.subr.bf16.mxu0 %v1532
    %1760 = vmatpush1.bf16.msra.mxu0 %v1531
    %1761 = vmatprep.subr.bf16.mxu0 %v1537
    %1762 = vmatpush1.bf16.msra.mxu0 %v1536
    %1763 = vmatprep.subr.bf16.mxu0 %v1542
    %1764 = vmatpush1.bf16.msra.mxu0 %v1541
    %1765 = vmatprep.subr.bf16.mxu0 %v1547
    %1766 = vmatpush1.bf16.msra.mxu0 %v1546
    %1767 = vmatprep.subr.bf16.mxu0 %v1552
    %1768 = vmatpush1.bf16.msra.mxu0 %v1551
    %1769 = vmatprep.subr.bf16.mxu0 %v1557
    %1770 = vmatpush1.bf16.msra.mxu0 %v1556
    %1771 = vmatprep.subr.bf16.mxu0 %v1562
    %1772 = vmatpush1.bf16.msra.mxu0 %v1561
    %1773 = vmatprep.subr.bf16.mxu0 %v1567
    %1774 = vmatpush1.bf16.msra.mxu0 %v1566
    %1775 = vmatprep.subr.bf16.mxu0 %v1572
    %1776 = vmatpush1.bf16.msra.mxu0 %v1571
    %1777 = vmatprep.subr.bf16.mxu0 %v1577
    %1778 = vmatpush1.bf16.msra.mxu0 %v1576
    %1779 = vmatprep.subr.bf16.mxu0 %v1582
    %1780 = vmatpush1.bf16.msra.mxu0 %v1581
    %1781 = vmatprep.subr.bf16.mxu0 %v1587
    %1782 = vmatpush1.bf16.msra.mxu0 %v1586
    %1783 = vmatprep.mubr.bf16.mxu0 %v1426
    %1784 = vmatmul.mubr.bf16.gmra.mrb[0].mxu0 %v1425
    %v1785 = vpop.f32.mrb[0].mxu0
    %v1786 = vadd.f32 0.0, %v1785
    %v1787 = vpop.f32.mrb[0].mxu0
    %v1788 = vadd.f32 0.0, %v1787
    %v1789 = vpop.f32.mrb[0].mxu0
    %v1790 = vpop.f32.mrb[0].mxu0
    %1791 = vdwg.mxu0
    %1792 = vmatprep.subr.bf16.mxu0 %v1592
    %1793 = vmatpush1.bf16.msra.mxu0 %v1591
    %1794 = vmatprep.subr.bf16.mxu0 %v1597
    %1795 = vmatpush1.bf16.msra.mxu0 %v1596
    %1796 = vmatprep.subr.bf16.mxu0 %v1602
    %1797 = vmatpush1.bf16.msra.mxu0 %v1601
    %1798 = vmatprep.subr.bf16.mxu0 %v1607
    %1799 = vmatpush1.bf16.msra.mxu0 %v1606
    %1800 = vmatprep.subr.bf16.mxu0 %v1612
    %1801 = vmatpush1.bf16.msra.mxu0 %v1611
    %1802 = vmatprep.subr.bf16.mxu0 %v1617
    %1803 = vmatpush1.bf16.msra.mxu0 %v1616
    %1804 = vmatprep.subr.bf16.mxu0 %v1622
    %1805 = vmatpush1.bf16.msra.mxu0 %v1621
    %1806 = vmatprep.subr.bf16.mxu0 %v1627
    %1807 = vmatpush1.bf16.msra.mxu0 %v1626
    %1808 = vmatprep.subr.bf16.mxu0 %v1632
    %1809 = vmatpush1.bf16.msra.mxu0 %v1631
    %1810 = vmatprep.subr.bf16.mxu0 %v1637
    %1811 = vmatpush1.bf16.msra.mxu0 %v1636
    %1812 = vmatprep.subr.bf16.mxu0 %v1642
    %1813 = vmatpush1.bf16.msra.mxu0 %v1641
    %1814 = vmatprep.subr.bf16.mxu0 %v1647
    %1815 = vmatpush1.bf16.msra.mxu0 %v1646
    %1816 = vmatprep.subr.bf16.mxu0 %v1652
    %1817 = vmatpush1.bf16.msra.mxu0 %v1651
    %1818 = vmatprep.subr.bf16.mxu0 %v1657
    %1819 = vmatpush1.bf16.msra.mxu0 %v1656
    %1820 = vmatprep.subr.bf16.mxu0 %v1662
    %1821 = vmatpush1.bf16.msra.mxu0 %v1661
    %1822 = vmatprep.subr.bf16.mxu0 %v1667
    %1823 = vmatpush1.bf16.msra.mxu0 %v1666
    %1824 = vmatprep.mubr.bf16.mxu0 %v1428
    %1825 = vmatmul.mubr.bf16.gmra.mrb[0].mxu0 %v1427
    %v1826 = vpop.f32.mrb[0].mxu0
    %v1827 = vadd.f32 %v1786, %v1826
    %v1828 = vpop.f32.mrb[0].mxu0
    %v1829 = vadd.f32 %v1788, %v1828
    %v1830 = vpop.f32.mrb[0].mxu0
    %v1831 = vpop.f32.mrb[0].mxu0
    %1832 = vdwg.mxu0
    %1833 = vmatprep.subr.bf16.mxu0 0
    %1834 = vmatpush1.bf16.msra.mxu0 %v1513
    %1835 = vmatprep.subr.bf16.mxu0 0
    %1836 = vmatpush1.bf16.msra.mxu0 %v1518
    %1837 = vmatprep.subr.bf16.mxu0 0
    %1838 = vmatpush1.bf16.msra.mxu0 %v1523
    %1839 = vmatprep.subr.bf16.mxu0 0
    %1840 = vmatpush1.bf16.msra.mxu0 %v1528
    %1841 = vmatprep.subr.bf16.mxu0 0
    %1842 = vmatpush1.bf16.msra.mxu0 %v1533
    %1843 = vmatprep.subr.bf16.mxu0 0
    %1844 = vmatpush1.bf16.msra.mxu0 %v1538
    %1845 = vmatprep.subr.bf16.mxu0 0
    %1846 = vmatpush1.bf16.msra.mxu0 %v1543
    %1847 = vmatprep.subr.bf16.mxu0 0
    %1848 = vmatpush1.bf16.msra.mxu0 %v1548
    %1849 = vmatprep.subr.bf16.mxu0 0
    %1850 = vmatpush1.bf16.msra.mxu0 %v1553
    %1851 = vmatprep.subr.bf16.mxu0 0
    %1852 = vmatpush1.bf16.msra.mxu0 %v1558
    %1853 = vmatprep.subr.bf16.mxu0 0
    %1854 = vmatpush1.bf16.msra.mxu0 %v1563
    %1855 = vmatprep.subr.bf16.mxu0 0
    %1856 = vmatpush1.bf16.msra.mxu0 %v1568
    %1857 = vmatprep.subr.bf16.mxu0 0
    %1858 = vmatpush1.bf16.msra.mxu0 %v1573
    %1859 = vmatprep.subr.bf16.mxu0 0
    %1860 = vmatpush1.bf16.msra.mxu0 %v1578
    %1861 = vmatprep.subr.bf16.mxu0 0
    %1862 = vmatpush1.bf16.msra.mxu0 %v1583
    %1863 = vmatprep.subr.bf16.mxu0 0
    %1864 = vmatpush1.bf16.msra.mxu0 %v1588
    %1865 = vmatprep.mubr.bf16.mxu0 %v1426
    %1866 = vmatmul.mubr.bf16.gmra.mrb[0].mxu0 %v1425
    %v1867 = vpop.f32.mrb[0].mxu0
    %v1868 = vadd.f32 0.0, %v1867
    %v1869 = vpop.f32.mrb[0].mxu0
    %v1870 = vpop.f32.mrb[0].mxu0
    %v1871 = vpop.f32.mrb[0].mxu0
    %1872 = vdwg.mxu0
    %1873 = vmatprep.subr.bf16.mxu0 0
    %1874 = vmatpush1.bf16.msra.mxu0 %v1593
    %1875 = vmatprep.subr.bf16.mxu0 0
    %1876 = vmatpush1.bf16.msra.mxu0 %v1598
    %1877 = vmatprep.subr.bf16.mxu0 0
    %1878 = vmatpush1.bf16.msra.mxu0 %v1603
    %1879 = vmatprep.subr.bf16.mxu0 0
    %1880 = vmatpush1.bf16.msra.mxu0 %v1608
    %1881 = vmatprep.subr.bf16.mxu0 0
    %1882 = vmatpush1.bf16.msra.mxu0 %v1613
    %1883 = vmatprep.subr.bf16.mxu0 0
    %1884 = vmatpush1.bf16.msra.mxu0 %v1618
    %1885 = vmatprep.subr.bf16.mxu0 0
    %1886 = vmatpush1.bf16.msra.mxu0 %v1623
    %1887 = vmatprep.subr.bf16.mxu0 0
    %1888 = vmatpush1.bf16.msra.mxu0 %v1628
    %1889 = vmatprep.subr.bf16.mxu0 0
    %1890 = vmatpush1.bf16.msra.mxu0 %v1633
    %1891 = vmatprep.subr.bf16.mxu0 0
    %1892 = vmatpush1.bf16.msra.mxu0 %v1638
    %1893 = vmatprep.subr.bf16.mxu0 0
    %1894 = vmatpush1.bf16.msra.mxu0 %v1643
    %1895 = vmatprep.subr.bf16.mxu0 0
    %1896 = vmatpush1.bf16.msra.mxu0 %v1648
    %1897 = vmatprep.subr.bf16.mxu0 0
    %1898 = vmatpush1.bf16.msra.mxu0 %v1653
    %1899 = vmatprep.subr.bf16.mxu0 0
    %1900 = vmatpush1.bf16.msra.mxu0 %v1658
    %1901 = vmatprep.subr.bf16.mxu0 0
    %1902 = vmatpush1.bf16.msra.mxu0 %v1663
    %1903 = vmatprep.subr.bf16.mxu0 0
    %1904 = vmatpush1.bf16.msra.mxu0 %v1668
    %1905 = vmatprep.mubr.bf16.mxu0 %v1428
    %1906 = vmatmul.mubr.bf16.gmra.mrb[0].mxu0 %v1427
    %v1907 = vpop.f32.mrb[0].mxu0
    %v1908 = vadd.f32 %v1868, %v1907
    %v1909 = vpop.f32.mrb[0].mxu0
    %v1910 = vpop.f32.mrb[0].mxu0
    %v1911 = vpop.f32.mrb[0].mxu0
    %1912 = vdwg.mxu0
    %v1913 = vld [vmem:[%s9] sm:$0x1f]
    %v1915 = vlaneseq
    %v1916 = vshrl.u32 %v1915, 7
    %v1917 = vsub.s32 0, %v1916
    %v1918 = vrot.slane %v1913, %v1917
    %v1919 = vlaneseq
    %v1920 = vshrl.u32 %v1919, 7
    %v1921 = vsub.s32 1, %v1920
    %v1922 = vrot.slane %v1913, %v1921
    %v1923 = vlaneseq
    %v1924 = vshrl.u32 %v1923, 7
    %v1925 = vsub.s32 2, %v1924
    %v1926 = vrot.slane %v1913, %v1925
    %v1927 = vlaneseq
    %v1928 = vshrl.u32 %v1927, 7
    %v1929 = vsub.s32 3, %v1928
    %v1930 = vrot.slane %v1913, %v1929
    %v1931 = vlaneseq
    %v1932 = vshrl.u32 %v1931, 7
    %v1933 = vsub.s32 4, %v1932
    %v1934 = vrot.slane %v1913, %v1933
    %v1940 = vmul.f32 %v1745, %v1918
    %v1941 = vmul.f32 %v1747, %v1922
    %v1942 = vmul.f32 %v1827, %v1926
    %v1943 = vmul.f32 %v1829, %v1930
    %v1944 = vmul.f32 %v1908, %v1934
    %v1945 = vld [vmem:[%s10] sm:$0x1f]
    %v1947 = vlaneseq
    %v1948 = vshrl.u32 %v1947, 7
    %v1949 = vsub.s32 0, %v1948
    %v1950 = vrot.slane %v1945, %v1949
    %v1951 = vlaneseq
    %v1952 = vshrl.u32 %v1951, 7
    %v1953 = vsub.s32 1, %v1952
    %v1954 = vrot.slane %v1945, %v1953
    %v1955 = vlaneseq
    %v1956 = vshrl.u32 %v1955, 7
    %v1957 = vsub.s32 2, %v1956
    %v1958 = vrot.slane %v1945, %v1957
    %v1959 = vlaneseq
    %v1960 = vshrl.u32 %v1959, 7
    %v1961 = vsub.s32 3, %v1960
    %v1962 = vrot.slane %v1945, %v1961
    %v1963 = vlaneseq
    %v1964 = vshrl.u32 %v1963, 7
    %v1965 = vsub.s32 4, %v1964
    %v1966 = vrot.slane %v1945, %v1965
    %v1972 = vadd.f32 %v1940, %v1950
    %v1973 = vadd.f32 %v1941, %v1954
    %v1974 = vadd.f32 %v1942, %v1958
    %v1975 = vadd.f32 %v1943, %v1962
    %v1976 = vadd.f32 %v1944, %v1966
    %v1977 = vmax.f32 %v1972, 0.0
    %v1978 = vmax.f32 %v1973, 0.0
    %v1979 = vmax.f32 %v1974, 0.0
    %v1980 = vmax.f32 %v1975, 0.0
    %v1981 = vpack.c.bf16 %v1977, %v1977
    %v1982 = vpack.c.bf16 %v1978, %v1978
    %v1983 = vpack.c.bf16 %v1979, %v1979
    %v1984 = vpack.c.bf16 %v1980, %v1980
    %v1985 = vld [vmem:[%s11] sm:$0xf]
    %v1986 = vld [vmem:[%s11 + $0x4] sm:$0xf]
    %v1987 = vld [vmem:[%s11 + $0x8] sm:$0xf]
    %v1988 = vld [vmem:[%s11 + $0xc] sm:$0xf]
    %v1989 = vld [vmem:[%s11 + $0x10] sm:$0xf]
    %v1990 = vld [vmem:[%s11 + $0x14] sm:$0xf]
    %v1991 = vld [vmem:[%s11 + $0x18] sm:$0xf]
    %v1992 = vld [vmem:[%s11 + $0x1c] sm:$0xf]
    %v1993 = vld [vmem:[%s11 + $0x20] sm:$0xf]
    %v1994 = vld [vmem:[%s11 + $0x24] sm:$0xf]
    %v1995 = vld [vmem:[%s11 + $0x28] sm:$0xf]
    %v1996 = vld [vmem:[%s11 + $0x2c] sm:$0xf]
    %v1997 = vld [vmem:[%s11 + $0x30] sm:$0xf]
    %v1998 = vld [vmem:[%s11 + $0x34] sm:$0xf]
    %v1999 = vld [vmem:[%s11 + $0x38] sm:$0xf]
    %v2000 = vld [vmem:[%s11 + $0x3c] sm:$0xf]
    %v2001 = vld [vmem:[%s11 + $0x40] sm:$0xf]
    %v2002 = vld [vmem:[%s11 + $0x44] sm:$0xf]
    %v2003 = vld [vmem:[%s11 + $0x48] sm:$0xf]
    %v2004 = vld [vmem:[%s11 + $0x4c] sm:$0xf]
    %v2005 = vld [vmem:[%s11 + $0x50] sm:$0xf]
    %v2006 = vld [vmem:[%s11 + $0x54] sm:$0xf]
    %v2007 = vld [vmem:[%s11 + $0x58] sm:$0xf]
    %v2008 = vld [vmem:[%s11 + $0x5c] sm:$0xf]
    %v2009 = vld [vmem:[%s11 + $0x60] sm:$0xf]
    %v2010 = vld [vmem:[%s11 + $0x64] sm:$0xf]
    %v2011 = vld [vmem:[%s11 + $0x68] sm:$0xf]
    %v2012 = vld [vmem:[%s11 + $0x6c] sm:$0xf]
    %v2013 = vld [vmem:[%s11 + $0x70] sm:$0xf]
    %v2014 = vld [vmem:[%s11 + $0x74] sm:$0xf]
    %v2015 = vld [vmem:[%s11 + $0x78] sm:$0xf]
    %v2016 = vld [vmem:[%s11 + $0x7c] sm:$0xf]
    %v2017 = vld [vmem:[%s11 + $0x80] sm:$0xf]
    %v2018 = vld [vmem:[%s11 + $0x84] sm:$0xf]
    %v2019 = vld [vmem:[%s11 + $0x88] sm:$0xf]
    %v2020 = vld [vmem:[%s11 + $0x8c] sm:$0xf]
    %v2021 = vld [vmem:[%s11 + $0x90] sm:$0xf]
    %v2022 = vld [vmem:[%s11 + $0x94] sm:$0xf]
    %v2023 = vld [vmem:[%s11 + $0x98] sm:$0xf]
    %v2024 = vld [vmem:[%s11 + $0x9c] sm:$0xf]
    %v2025 = vld [vmem:[%s11 + $0xa0] sm:$0xf]
    %v2026 = vld [vmem:[%s11 + $0xa4] sm:$0xf]
    %v2027 = vld [vmem:[%s11 + $0xa8] sm:$0xf]
    %v2028 = vld [vmem:[%s11 + $0xac] sm:$0xf]
    %v2029 = vld [vmem:[%s11 + $0xb0] sm:$0xf]
    %v2030 = vld [vmem:[%s11 + $0xb4] sm:$0xf]
    %v2031 = vld [vmem:[%s11 + $0xb8] sm:$0xf]
    %v2032 = vld [vmem:[%s11 + $0xbc] sm:$0xf]
    %v2033 = vld [vmem:[%s11 + $0xc0] sm:$0xf]
    %v2034 = vld [vmem:[%s11 + $0xc4] sm:$0xf]
    %v2035 = vld [vmem:[%s11 + $0xc8] sm:$0xf]
    %v2036 = vld [vmem:[%s11 + $0xcc] sm:$0xf]
    %v2037 = vld [vmem:[%s11 + $0xd0] sm:$0xf]
    %v2038 = vld [vmem:[%s11 + $0xd4] sm:$0xf]
    %v2039 = vld [vmem:[%s11 + $0xd8] sm:$0xf]
    %v2040 = vld [vmem:[%s11 + $0xdc] sm:$0xf]
    %v2041 = vld [vmem:[%s11 + $0xe0] sm:$0xf]
    %v2042 = vld [vmem:[%s11 + $0xe4] sm:$0xf]
    %v2043 = vld [vmem:[%s11 + $0xe8] sm:$0xf]
    %v2044 = vld [vmem:[%s11 + $0xec] sm:$0xf]
    %v2045 = vld [vmem:[%s11 + $0xf0] sm:$0xf]
    %v2046 = vld [vmem:[%s11 + $0xf4] sm:$0xf]
    %v2047 = vld [vmem:[%s11 + $0xf8] sm:$0xf]
    %v2048 = vld [vmem:[%s11 + $0xfc] sm:$0xf]
    %v2049 = vld [vmem:[%s12] sm:$0x1]
    %v2051 = vlaneseq
    %v2052 = vshrl.u32 %v2051, 7
    %v2053 = vsub.s32 0, %v2052
    %v2054 = vrot.slane %v2049, %v2053
    %v2120 = vunpack.c.l.b16 %v1985
    %v2121 = vunpack.c.l.b16 %v1986
    %v2122 = vunpack.c.l.b16 %v1987
    %v2123 = vunpack.c.l.b16 %v1988
    %v2124 = vunpack.c.l.b16 %v1989
    %v2125 = vunpack.c.l.b16 %v1990
    %v2126 = vunpack.c.l.b16 %v1991
    %v2127 = vunpack.c.l.b16 %v1992
    %v2128 = vunpack.c.l.b16 %v1993
    %v2129 = vunpack.c.l.b16 %v1994
    %v2130 = vunpack.c.l.b16 %v1995
    %v2131 = vunpack.c.l.b16 %v1996
    %v2132 = vunpack.c.l.b16 %v1997
    %v2133 = vunpack.c.l.b16 %v1998
    %v2134 = vunpack.c.l.b16 %v1999
    %v2135 = vunpack.c.l.b16 %v2000
    %v2136 = vunpack.c.l.b16 %v2001
    %v2137 = vunpack.c.l.b16 %v2002
    %v2138 = vunpack.c.l.b16 %v2003
    %v2139 = vunpack.c.l.b16 %v2004
    %v2140 = vunpack.c.l.b16 %v2005
    %v2141 = vunpack.c.l.b16 %v2006
    %v2142 = vunpack.c.l.b16 %v2007
    %v2143 = vunpack.c.l.b16 %v2008
    %v2144 = vunpack.c.l.b16 %v2009
    %v2145 = vunpack.c.l.b16 %v2010
    %v2146 = vunpack.c.l.b16 %v2011
    %v2147 = vunpack.c.l.b16 %v2012
    %v2148 = vunpack.c.l.b16 %v2013
    %v2149 = vunpack.c.l.b16 %v2014
    %v2150 = vunpack.c.l.b16 %v2015
    %v2151 = vunpack.c.l.b16 %v2016
    %v2152 = vunpack.c.l.b16 %v2017
    %v2153 = vunpack.c.l.b16 %v2018
    %v2154 = vunpack.c.l.b16 %v2019
    %v2155 = vunpack.c.l.b16 %v2020
    %v2156 = vunpack.c.l.b16 %v2021
    %v2157 = vunpack.c.l.b16 %v2022
    %v2158 = vunpack.c.l.b16 %v2023
    %v2159 = vunpack.c.l.b16 %v2024
    %v2160 = vunpack.c.l.b16 %v2025
    %v2161 = vunpack.c.l.b16 %v2026
    %v2162 = vunpack.c.l.b16 %v2027
    %v2163 = vunpack.c.l.b16 %v2028
    %v2164 = vunpack.c.l.b16 %v2029
    %v2165 = vunpack.c.l.b16 %v2030
    %v2166 = vunpack.c.l.b16 %v2031
    %v2167 = vunpack.c.l.b16 %v2032
    %v2168 = vunpack.c.l.b16 %v2033
    %v2169 = vunpack.c.l.b16 %v2034
    %v2170 = vunpack.c.l.b16 %v2035
    %v2171 = vunpack.c.l.b16 %v2036
    %v2172 = vunpack.c.l.b16 %v2037
    %v2173 = vunpack.c.l.b16 %v2038
    %v2174 = vunpack.c.l.b16 %v2039
    %v2175 = vunpack.c.l.b16 %v2040
    %v2176 = vunpack.c.l.b16 %v2041
    %v2177 = vunpack.c.l.b16 %v2042
    %v2178 = vunpack.c.l.b16 %v2043
    %v2179 = vunpack.c.l.b16 %v2044
    %v2180 = vunpack.c.l.b16 %v2045
    %v2181 = vunpack.c.l.b16 %v2046
    %v2182 = vunpack.c.l.b16 %v2047
    %v2183 = vunpack.c.l.b16 %v2048
    %v2184 = vpack.c.b16 %v2121, %v2120
    %v2185 = vpack.c.b16 %v2123, %v2122
    %v2186 = vpack.c.b16 %v2125, %v2124
    %v2187 = vpack.c.b16 %v2127, %v2126
    %v2188 = vpack.c.b16 %v2129, %v2128
    %v2189 = vpack.c.b16 %v2131, %v2130
    %v2190 = vpack.c.b16 %v2133, %v2132
    %v2191 = vpack.c.b16 %v2135, %v2134
    %v2192 = vpack.c.b16 %v2137, %v2136
    %v2193 = vpack.c.b16 %v2139, %v2138
    %v2194 = vpack.c.b16 %v2141, %v2140
    %v2195 = vpack.c.b16 %v2143, %v2142
    %v2196 = vpack.c.b16 %v2145, %v2144
    %v2197 = vpack.c.b16 %v2147, %v2146
    %v2198 = vpack.c.b16 %v2149, %v2148
    %v2199 = vpack.c.b16 %v2151, %v2150
    %v2200 = vpack.c.b16 %v2153, %v2152
    %v2201 = vpack.c.b16 %v2155, %v2154
    %v2202 = vpack.c.b16 %v2157, %v2156
    %v2203 = vpack.c.b16 %v2159, %v2158
    %v2204 = vpack.c.b16 %v2161, %v2160
    %v2205 = vpack.c.b16 %v2163, %v2162
    %v2206 = vpack.c.b16 %v2165, %v2164
    %v2207 = vpack.c.b16 %v2167, %v2166
    %v2208 = vpack.c.b16 %v2169, %v2168
    %v2209 = vpack.c.b16 %v2171, %v2170
    %v2210 = vpack.c.b16 %v2173, %v2172
    %v2211 = vpack.c.b16 %v2175, %v2174
    %v2212 = vpack.c.b16 %v2177, %v2176
    %v2213 = vpack.c.b16 %v2179, %v2178
    %v2214 = vpack.c.b16 %v2181, %v2180
    %v2215 = vpack.c.b16 %v2183, %v2182
    %2248 = vmatprep.subr.bf16.mxu0 0
    %2249 = vmatpush1.bf16.msra.mxu0 %v2184
    %2250 = vmatprep.subr.bf16.mxu0 0
    %2251 = vmatpush1.bf16.msra.mxu0 %v2185
    %2252 = vmatprep.subr.bf16.mxu0 0
    %2253 = vmatpush1.bf16.msra.mxu0 %v2186
    %2254 = vmatprep.subr.bf16.mxu0 0
    %2255 = vmatpush1.bf16.msra.mxu0 %v2187
    %2256 = vmatprep.subr.bf16.mxu0 0
    %2257 = vmatpush1.bf16.msra.mxu0 %v2188
    %2258 = vmatprep.subr.bf16.mxu0 0
    %2259 = vmatpush1.bf16.msra.mxu0 %v2189
    %2260 = vmatprep.subr.bf16.mxu0 0
    %2261 = vmatpush1.bf16.msra.mxu0 %v2190
    %2262 = vmatprep.subr.bf16.mxu0 0
    %2263 = vmatpush1.bf16.msra.mxu0 %v2191
    %2264 = vmatprep.subr.bf16.mxu0 0
    %2265 = vmatpush1.bf16.msra.mxu0 %v2192
    %2266 = vmatprep.subr.bf16.mxu0 0
    %2267 = vmatpush1.bf16.msra.mxu0 %v2193
    %2268 = vmatprep.subr.bf16.mxu0 0
    %2269 = vmatpush1.bf16.msra.mxu0 %v2194
    %2270 = vmatprep.subr.bf16.mxu0 0
    %2271 = vmatpush1.bf16.msra.mxu0 %v2195
    %2272 = vmatprep.subr.bf16.mxu0 0
    %2273 = vmatpush1.bf16.msra.mxu0 %v2196
    %2274 = vmatprep.subr.bf16.mxu0 0
    %2275 = vmatpush1.bf16.msra.mxu0 %v2197
    %2276 = vmatprep.subr.bf16.mxu0 0
    %2277 = vmatpush1.bf16.msra.mxu0 %v2198
    %2278 = vmatprep.subr.bf16.mxu0 0
    %2279 = vmatpush1.bf16.msra.mxu0 %v2199
    %2280 = vmatprep.mubr.bf16.mxu0 %v1982
    %2281 = vmatmul.mubr.bf16.gmra.mrb[0].mxu0 %v1981
    %v2282 = vpop.f32.mrb[0].mxu0
    %v2283 = vadd.f32 %v2054, %v2282
    %v2284 = vpop.f32.mrb[0].mxu0
    %v2285 = vpop.f32.mrb[0].mxu0
    %v2286 = vpop.f32.mrb[0].mxu0
    %2287 = vdwg.mxu0
    %2288 = vmatprep.subr.bf16.mxu0 0
    %2289 = vmatpush1.bf16.msra.mxu0 %v2200
    %2290 = vmatprep.subr.bf16.mxu0 0
    %2291 = vmatpush1.bf16.msra.mxu0 %v2201
    %2292 = vmatprep.subr.bf16.mxu0 0
    %2293 = vmatpush1.bf16.msra.mxu0 %v2202
    %2294 = vmatprep.subr.bf16.mxu0 0
    %2295 = vmatpush1.bf16.msra.mxu0 %v2203
    %2296 = vmatprep.subr.bf16.mxu0 0
    %2297 = vmatpush1.bf16.msra.mxu0 %v2204
    %2298 = vmatprep.subr.bf16.mxu0 0
    %2299 = vmatpush1.bf16.msra.mxu0 %v2205
    %2300 = vmatprep.subr.bf16.mxu0 0
    %2301 = vmatpush1.bf16.msra.mxu0 %v2206
    %2302 = vmatprep.subr.bf16.mxu0 0
    %2303 = vmatpush1.bf16.msra.mxu0 %v2207
    %2304 = vmatprep.subr.bf16.mxu0 0
    %2305 = vmatpush1.bf16.msra.mxu0 %v2208
    %2306 = vmatprep.subr.bf16.mxu0 0
    %2307 = vmatpush1.bf16.msra.mxu0 %v2209
    %2308 = vmatprep.subr.bf16.mxu0 0
    %2309 = vmatpush1.bf16.msra.mxu0 %v2210
    %2310 = vmatprep.subr.bf16.mxu0 0
    %2311 = vmatpush1.bf16.msra.mxu0 %v2211
    %2312 = vmatprep.subr.bf16.mxu0 0
    %2313 = vmatpush1.bf16.msra.mxu0 %v2212
    %2314 = vmatprep.subr.bf16.mxu0 0
    %2315 = vmatpush1.bf16.msra.mxu0 %v2213
    %2316 = vmatprep.subr.bf16.mxu0 0
    %2317 = vmatpush1.bf16.msra.mxu0 %v2214
    %2318 = vmatprep.subr.bf16.mxu0 0
    %2319 = vmatpush1.bf16.msra.mxu0 %v2215
    %2320 = vmatprep.mubr.bf16.mxu0 %v1984
    %2321 = vmatmul.mubr.bf16.gmra.mrb[0].mxu0 %v1983
    %v2322 = vpop.f32.mrb[0].mxu0
    %v2323 = vadd.f32 %v2283, %v2322
    %v2324 = vpop.f32.mrb[0].mxu0
    %v2325 = vpop.f32.mrb[0].mxu0
    %v2326 = vpop.f32.mrb[0].mxu0
    %2327 = vdwg.mxu0
    %vm2328 = vcmask 9216
    %v2329 = vsel %vm2328, %v2323, -inf
    %2330 = vmax.xlane.f32.xlu0 %v2329
    %v2331 = vpop.xlane.xlu0 %2330
    %v2332 = vsub.f32 %v2323, %v2331
    %v2333 = vmul.f32 %v2332, 1.442695
    %v2334 = vpow.pop %v2333
    %v2335 = vsel %vm2328, %v2334, 0.0
    %2336 = vadd.xlane.f32.xlu0 %v2335
    %v2337 = vpop.xlane.xlu0 %2336
    %v2338 = vlog2.pop %v2337
    %v2339 = vmul.f32 %v2338, 0.6931472
    %v2340 = vsub.f32 %v2332, %v2339
    %2341 = vst.msk [vmem:[#allocation12] sm:$0x3] %vm2328, %v2340
    %vm2342 = vcmask 58368
    %v2343 = vsel %vm2342, %v1976, -inf
    %2344 = vmax.xlane.f32.xlu0 %v2343
    %v2345 = vpop.xlane.xlu0 %2344
    %v2346 = vsub.f32 %v1976, %v2345
    %v2347 = vmul.f32 %v2346, 1.442695
    %v2348 = vpow.pop %v2347
    %v2349 = vsel %vm2342, %v2348, 0.0
    %2350 = vadd.xlane.f32.xlu0 %v2349
    %v2351 = vpop.xlane.xlu0 %2350
    %v2352 = vlog2.pop %v2351
    %v2353 = vmul.f32 %v2352, 0.6931472
    %v2354 = vsub.f32 %v2346, %v2353
    %2355 = vst.msk [vmem:[#allocation11] sm:$0x3] %vm2342, %v2354
    // Predicated region
    $region74: #{_lambda_.1} parent=1 // pred_check
      _
    $region75: #{_lambda_.1} parent=1 // pred_check_branch
      %2357 = sbr.rel (0) target = $region77
    $region76: #{_lambda_.1} parent=1 // pred_region
      %s2359 = ssub.s32 32, 32
      %2360 = vsyncadd [#allocation4], %s2359
      %s2362 = sshll.u32 [#allocation11], 4
      %s2363 = int_to_ptr.vmem [resolvable:$true] %s2362
      %2365 = dma.vmem_to_hbm [thread:$0]  %s2363, 32, %s13, [#allocation4]
    $region77: #{_lambda_.1} parent=1 // pred_fallthru
      _
    // Predicated region
    $region78: #{_lambda_.1} parent=1 // pred_check
      _
    $region79: #{_lambda_.1} parent=1 // pred_check_branch
      %2367 = sbr.rel (0) target = $region81
    $region80: #{_lambda_.1} parent=1 // pred_region
      %s2369 = ssub.s32 32, 32
      %2370 = vsyncadd [#allocation13], %s2369
      %s2372 = sshll.u32 [#allocation12], 4
      %s2373 = int_to_ptr.vmem [resolvable:$true] %s2372
      %2375 = dma.vmem_to_hbm [thread:$0]  %s2373, 32, %s14, [#allocation13]
    $region81: #{_lambda_.1} parent=1 // pred_fallthru
      _
    // Predicated region
    $region82: #{_lambda_.1} parent=1 // pred_check
      _
    $region83: #{_lambda_.1} parent=1 // pred_check_branch
      %2377 = sbr.rel (0) target = $region85
    $region84: #{_lambda_.1} parent=1 // pred_region
      %2378 = dma.done [#allocation4], 32
    $region85: #{_lambda_.1} parent=1 // pred_fallthru
      _
    // Predicated region
    $region86: #{_lambda_.1} parent=1 // pred_check
      _
    $region87: #{_lambda_.1} parent=1 // pred_check_branch
      %2380 = sbr.rel (0) target = $region89
    $region88: #{_lambda_.1} parent=1 // pred_region
      %2381 = dma.done [#allocation13], 32
    $region89: #{_lambda_.1} parent=1 // pred_fallthru
      _
    %2382 = vsyncpa [#allocation3], 1
    %2383 = vsyncpa [#allocation6], 1
    %2384 = vsyncpa [#allocation9], 1
    %2385 = vsyncpa [#allocation4], 1
    %2386 = vsyncpa [#allocation13], 1

</llo_original>
